<compile_context>
chip_gen: v7x
topology: tpu7x:2x2x1
jax: 0.10.0
libtpu: 0.0.40
codegen_flags: <defaults>
</compile_context>

<pallas_src>
import functools

import jax
import jax.numpy as jnp
from jax.experimental import pallas as pl
from jax.experimental.pallas import tpu as pltpu


def _lstm_cluster_kernel(num_layers, seq_len, input_size, hidden_size, output_size, eps,
                         x_ref, w_ihf_ref, w_hh_ref, vec_ref, out_ref):
    """Stacked LSTM -> BatchNorm1d (batch stats) -> ReLU -> Linear, single invocation.

    Refs:
      x_ref     : (T*B, I)         f32   time-major flattened input
      w_ihf_ref : (L+1, I_max, 4H) bf16  per-layer W_ih^T (rows >= I_l zero); slab L is
                                         the FC weight^T lane-padded to 4H (cols >= O zero)
      w_hh_ref  : (L, H, 4H)       bf16  per-layer W_hh^T
      vec_ref   : (L+3, 4H)        f32   rows 0..L-1: b_ih+b_hh; L: gamma; L+1: beta; L+2: fc bias
      out_ref   : (B, O)           f32
    """
    L, T, I, H, O = num_layers, seq_len, input_size, hidden_size, output_size
    B = out_ref.shape[0]

    def cell(pre, c):
        # Full-tile activations (one sigmoid + one tanh EUP push), then lane-slice.
        sig = jax.nn.sigmoid(pre)
        th = jnp.tanh(pre)
        i_g = sig[:, 0 * H:1 * H]
        f_g = sig[:, 1 * H:2 * H]
        g_g = th[:, 2 * H:3 * H]
        o_g = sig[:, 3 * H:4 * H]
        c = f_g * c + i_g * g_g
        h = o_g * jnp.tanh(c)
        return h, c

    # ---- layer 0: hoisted batched input projection (x is available upfront) ----
    w_ih0 = w_ihf_ref[0, :I, :]                                  # (I, 4H) bf16
    b0 = vec_ref[0:1, :]                                         # (1, 4H) f32
    gx0 = jnp.dot(x_ref[...].astype(jnp.bfloat16), w_ih0,
                  preferred_element_type=jnp.float32) + b0       # (T*B, 4H) f32

    hs_prev = None
    for l in range(L):
        w_hh = w_hh_ref[l]                                       # (H, 4H) bf16
        h = jnp.zeros((B, H), jnp.float32)
        c = jnp.zeros((B, H), jnp.float32)
        hs = []
        if l == 0:
            for t in range(T):                                   # serial recurrence (T static)
                pre = gx0[t * B:(t + 1) * B, :] + jnp.dot(
                    h.astype(jnp.bfloat16), w_hh,
                    preferred_element_type=jnp.float32)          # (B, 4H) f32
                h, c = cell(pre, c)
                hs.append(h)
        else:
            w_ih = w_ihf_ref[l, :H, :]                           # (H, 4H) bf16
            b = vec_ref[l:l + 1, :]                              # (1, 4H) f32
            for t in range(T):
                # Input projection depends only on the SAME timestep of the previous
                # layer (register value), so the cross-layer critical path stays at
                # T + L - 1 dependent steps instead of L * T.
                gx = jnp.dot(hs_prev[t].astype(jnp.bfloat16), w_ih,
                             preferred_element_type=jnp.float32) + b
                pre = gx + jnp.dot(h.astype(jnp.bfloat16), w_hh,
                                   preferred_element_type=jnp.float32)
                h, c = cell(pre, c)
                hs.append(h)
        # TODO(synk): nn.LSTM applies dropout(p=0.2) between layers only in training
        # mode (stochastic); eval-mode (identity) semantics here.
        hs_prev = hs

    # ---- BatchNorm1d(H): per-channel training-mode batch stats over (B, T) ----
    inv_n = 1.0 / float(T * B)
    tot = jnp.zeros((1, H), jnp.float32)
    for t in range(T):
        tot = tot + jnp.sum(hs_prev[t], axis=0, keepdims=True)
    mean = tot * inv_n                                           # (1, H)
    sq = jnp.zeros((1, H), jnp.float32)
    for t in range(T):
        d = hs_prev[t] - mean
        sq = sq + jnp.sum(d * d, axis=0, keepdims=True)
    var = sq * inv_n                                             # biased var (PyTorch BN)

    gamma = vec_ref[L:L + 1, 0:H]                                # (1, H)
    beta = vec_ref[L + 1:L + 2, 0:H]                             # (1, H)
    last = hs_prev[T - 1]                                        # == out[:, -1, :], (B, H)
    normed = (last - mean) * jax.lax.rsqrt(var + eps) * gamma + beta
    act = jnp.maximum(normed, 0.0)                               # ReLU

    # ---- final Linear: FC weight is slab L of the W_ih pack, lane-padded to 4H ----
    fc_w = w_ihf_ref[L, :H, :]                                   # (H, 4H) bf16, cols >= O zero
    y = jnp.dot(act.astype(jnp.bfloat16), fc_w,
                preferred_element_type=jnp.float32)              # (B, 4H) f32
    fc_b = vec_ref[L + 2:L + 3, 0:O]                             # (1, O)
    out_ref[...] = (y[:, :O] + fc_b).astype(out_ref.dtype)


def prepare_params(lstm_weights, gamma, beta, fc_w, fc_b):
    """One-time packing of LSTM/BN/FC params into 3 coalesced kernel operands.

    lstm_weights: list of (w_ih (4H, I_l), w_hh (4H, H), b_ih (4H,), b_hh (4H,)).
    Returns (w_ihf_pack bf16, w_hh_pack bf16, vec_pack f32).
    """
    L = len(lstm_weights)
    H = lstm_weights[0][1].shape[1]
    G = 4 * H
    O = fc_w.shape[0]
    I0 = lstm_weights[0][0].shape[1]
    I_max = max(I0, H)
    assert O <= G and H <= I_max

    w_ihf = jnp.zeros((L + 1, I_max, G), jnp.float32)
    w_hh_pack = jnp.zeros((L, H, G), jnp.float32)
    vec = jnp.zeros((L + 3, G), jnp.float32)
    for l, (w_ih, w_hh, b_ih, b_hh) in enumerate(lstm_weights):
        w_ihf = w_ihf.at[l, :w_ih.shape[1], :].set(jnp.transpose(w_ih))
        w_hh_pack = w_hh_pack.at[l].set(jnp.transpose(w_hh))
        vec = vec.at[l, :].set(b_ih + b_hh)                      # fused bias
    w_ihf = w_ihf.at[L, :H, :O].set(jnp.transpose(fc_w))         # FC weight, lane-padded
    vec = vec.at[L, :H].set(gamma)
    vec = vec.at[L + 1, :H].set(beta)
    vec = vec.at[L + 2, :O].set(fc_b)
    return w_ihf.astype(jnp.bfloat16), w_hh_pack.astype(jnp.bfloat16), vec


@functools.partial(jax.jit, static_argnames=("output_size", "eps"))
def lstm_cluster_forward(x, w_ihf_pack, w_hh_pack, vec_pack, *, output_size, eps=1e-5):
    B, T, I = x.shape
    L, H, _ = w_hh_pack.shape
    O = output_size
    # Time-major flattened layout: row block t*B:(t+1)*B is timestep t (lane-friendly).
    x_flat = jnp.transpose(x, (1, 0, 2)).reshape(T * B, I).astype(jnp.float32)

    kernel = functools.partial(_lstm_cluster_kernel, L, T, I, H, O, eps)
    return pl.pallas_call(
        kernel,
        out_shape=jax.ShapeDtypeStruct((B, O), jnp.float32),
        grid=(1,),
        in_specs=[
            pl.BlockSpec((T * B, I), lambda i: (0, 0)),
            pl.BlockSpec(w_ihf_pack.shape, lambda i: (0, 0, 0)),
            pl.BlockSpec(w_hh_pack.shape, lambda i: (0, 0, 0)),
            pl.BlockSpec(vec_pack.shape, lambda i: (0, 0)),
        ],
        out_specs=pl.BlockSpec((B, O), lambda i: (0, 0)),
        # NOTE: grid=(1,) — the B=2 recurrence is latency-bound, and BatchNorm needs
        # cross-batch stats, so the way to use v7x's 2nd TensorCore is a parallel grid
        # axis over independent LSTM_Cluster instances, not over this tiny batch.
        compiler_params=pltpu.CompilerParams(dimension_semantics=("arbitrary",)),
    )(x_flat, w_ihf_pack, w_hh_pack, vec_pack)


def _reference_forward(x, lstm_weights, gamma, beta, fc_w, fc_b, hidden_size,
                       eps=1e-5, mm_dtype=jnp.float32):
    """Pure-JAX reference. mm_dtype=bf16 mirrors the kernel's precision policy;
    mm_dtype=f32 is the full-precision PyTorch-module math."""
    B, T, _ = x.shape
    H = hidden_size
    seq = x.astype(jnp.float32)
    for (w_ih, w_hh, b_ih, b_hh) in lstm_weights:
        wi = jnp.transpose(w_ih).astype(mm_dtype)
        wh = jnp.transpose(w_hh).astype(mm_dtype)
        b = (b_ih + b_hh)[None, :]
        h = jnp.zeros((B, H), jnp.float32)
        c = jnp.zeros((B, H), jnp.float32)
        outs = []
        for t in range(T):
            g = (jnp.dot(seq[:, t, :].astype(mm_dtype), wi, preferred_element_type=jnp.float32)
                 + jnp.dot(h.astype(mm_dtype), wh, preferred_element_type=jnp.float32) + b)
            i_g = jax.nn.sigmoid(g[:, :H])
            f_g = jax.nn.sigmoid(g[:, H:2 * H])
            g_g = jnp.tanh(g[:, 2 * H:3 * H])
            o_g = jax.nn.sigmoid(g[:, 3 * H:])
            c = f_g * c + i_g * g_g
            h = o_g * jnp.tanh(c)
            outs.append(h)
        seq = jnp.stack(outs, axis=1)
    mean = jnp.mean(seq, axis=(0, 1))
    var = jnp.mean((seq - mean) ** 2, axis=(0, 1))
    normed = (seq[:, -1, :] - mean) * jax.lax.rsqrt(var + eps) * gamma + beta
    act = jnp.maximum(normed, 0.0)
    return jnp.dot(act.astype(mm_dtype), jnp.transpose(fc_w).astype(mm_dtype),
                   preferred_element_type=jnp.float32) + fc_b


if __name__ == "__main__":
    batch, seq_len = 2, 8
    input_size, hidden_size, num_layers, output_size = 8, 32, 2, 8

    key = jax.random.PRNGKey(0)
    k = 1.0 / jnp.sqrt(jnp.float32(hidden_size))

    lstm_weights = []
    for layer in range(num_layers):
        in_l = input_size if layer == 0 else hidden_size
        key, k1, k2, k3, k4 = jax.random.split(key, 5)
        w_ih = jax.random.uniform(k1, (4 * hidden_size, in_l), jnp.float32, -k, k)
        w_hh = jax.random.uniform(k2, (4 * hidden_size, hidden_size), jnp.float32, -k, k)
        b_ih = jax.random.uniform(k3, (4 * hidden_size,), jnp.float32, -k, k)
        b_hh = jax.random.uniform(k4, (4 * hidden_size,), jnp.float32, -k, k)
        lstm_weights.append((w_ih, w_hh, b_ih, b_hh))

    gamma = jnp.ones((hidden_size,), jnp.float32)   # BatchNorm1d default weight
    beta = jnp.zeros((hidden_size,), jnp.float32)   # BatchNorm1d default bias

    key, kw, kb, kx = jax.random.split(key, 4)
    kf = 1.0 / jnp.sqrt(jnp.float32(hidden_size))
    fc_w = jax.random.uniform(kw, (output_size, hidden_size), jnp.float32, -kf, kf)
    fc_b = jax.random.uniform(kb, (output_size,), jnp.float32, -kf, kf)

    x = jax.random.normal(kx, (batch, seq_len, input_size), jnp.float32)

    # One-time parameter packing (hoisted out of the per-call path).
    w_ihf_pack, w_hh_pack, vec_pack = prepare_params(lstm_weights, gamma, beta, fc_w, fc_b)

    out = lstm_cluster_forward(x, w_ihf_pack, w_hh_pack, vec_pack, output_size=output_size)
    out = jax.block_until_ready(out)
    assert out.shape == (batch, output_size)

    # Strict check: reference using the kernel's precision policy (bf16 matmul
    # operands, f32 accumulation / elementwise math).
    ref_bf16 = _reference_forward(x, lstm_weights, gamma, beta, fc_w, fc_b,
                                  hidden_size, mm_dtype=jnp.bfloat16)
    assert jnp.allclose(out, ref_bf16, atol=1e-3, rtol=1e-3), (out, ref_bf16)

    # Fidelity check vs. full-f32 module math (gap = bf16 matmul quantization only).
    ref_f32 = _reference_forward(x, lstm_weights, gamma, beta, fc_w, fc_b,
                                 hidden_size, mm_dtype=jnp.float32)
    max_diff = float(jnp.max(jnp.abs(out - ref_f32)))
    assert max_diff < 1e-1, (max_diff, out, ref_f32)

    print("KERNEL_OK")
</pallas_src>

<mosaic_0001>
module attributes {stable_mosaic.version = 11 : i64} {
  func.func @_lstm_cluster_kernel(%arg0: i32, %arg1: memref<16x8xf32, #tpu.memory_space<vmem>>, %arg2: memref<3x32x128xbf16, #tpu.memory_space<vmem>>, %arg3: memref<2x32x128xbf16, #tpu.memory_space<vmem>>, %arg4: memref<5x128xf32, #tpu.memory_space<vmem>>, %arg5: memref<2x8xf32, #tpu.memory_space<vmem>>) attributes {dimension_semantics = [#tpu.dimension_semantics<arbitrary>], iteration_bounds = array<i64: 1>, scalar_prefetch = 0 : i64, scratch_operands = 0 : i64, tpu.core_type = #tpu.core_type<tc>, window_params = [{pipeline_mode = #tpu.pipeline_mode<synchronous>, transform_indices = @transform_0, window_bounds = array<i64: 16, 8>}, {pipeline_mode = #tpu.pipeline_mode<synchronous>, transform_indices = @transform_1, window_bounds = array<i64: 3, 32, 128>}, {pipeline_mode = #tpu.pipeline_mode<synchronous>, transform_indices = @transform_2, window_bounds = array<i64: 2, 32, 128>}, {pipeline_mode = #tpu.pipeline_mode<synchronous>, transform_indices = @transform_3, window_bounds = array<i64: 5, 128>}, {pipeline_mode = #tpu.pipeline_mode<synchronous>, transform_indices = @transform_4, window_bounds = array<i64: 2, 8>}]} {
    %c0 = arith.constant 0 : index
    %c0_0 = arith.constant 0 : index
    %c0_1 = arith.constant 0 : index
    %0 = vector.load %arg2[%c0, %c0_0, %c0_1] : memref<3x32x128xbf16, #tpu.memory_space<vmem>>, vector<1x8x128xbf16>
    %1 = vector.shape_cast %0 : vector<1x8x128xbf16> to vector<8x128xbf16>
    %c0_2 = arith.constant 0 : index
    %c0_3 = arith.constant 0 : index
    %2 = vector.load %arg4[%c0_2, %c0_3] : memref<5x128xf32, #tpu.memory_space<vmem>>, vector<1x128xf32>
    %c0_4 = arith.constant 0 : index
    %c0_5 = arith.constant 0 : index
    %3 = vector.load %arg1[%c0_4, %c0_5] : memref<16x8xf32, #tpu.memory_space<vmem>>, vector<16x8xf32>
    %4 = arith.truncf %3 : vector<16x8xf32> to vector<16x8xbf16>
    %cst = arith.constant dense<0.000000e+00> : vector<16x128xf32>
    %5 = tpu.matmul %4, %1, %cst {dimension_numbers = #tpu.dot_dimension_numbers<[1], [0], [0], [1], [0, 0, 1, 1], [], []>} : vector<16x8xbf16>, vector<8x128xbf16>, vector<16x128xf32> -> vector<16x128xf32>
    %6 = vector.broadcast %2 : vector<1x128xf32> to vector<16x128xf32>
    %7 = arith.addf %5, %6 : vector<16x128xf32>
    %c0_6 = arith.constant 0 : index
    %c0_7 = arith.constant 0 : index
    %c0_8 = arith.constant 0 : index
    %8 = vector.load %arg3[%c0_6, %c0_7, %c0_8] : memref<2x32x128xbf16, #tpu.memory_space<vmem>>, vector<1x32x128xbf16>
    %9 = vector.shape_cast %8 : vector<1x32x128xbf16> to vector<32x128xbf16>
    %cst_9 = arith.constant 0.000000e+00 : f32
    %10 = vector.broadcast %cst_9 : f32 to vector<2x32xf32>
    %cst_10 = arith.constant 0.000000e+00 : f32
    %11 = vector.broadcast %cst_10 : f32 to vector<2x32xf32>
    %12 = vector.extract_strided_slice %7 {offsets = [0, 0], sizes = [2, 128], strides = [1, 1]} : vector<16x128xf32> to vector<2x128xf32>
    %13 = arith.truncf %10 : vector<2x32xf32> to vector<2x32xbf16>
    %cst_11 = arith.constant dense<0.000000e+00> : vector<2x128xf32>
    %14 = tpu.matmul %13, %9, %cst_11 {dimension_numbers = #tpu.dot_dimension_numbers<[1], [0], [0], [1], [0, 0, 1, 1], [], []>} : vector<2x32xbf16>, vector<32x128xbf16>, vector<2x128xf32> -> vector<2x128xf32>
    %15 = arith.addf %12, %14 : vector<2x128xf32>
    %16 = arith.negf %15 : vector<2x128xf32>
    %17 = math.exp %16 : vector<2x128xf32>
    %cst_12 = arith.constant 1.000000e+00 : f32
    %18 = vector.broadcast %cst_12 : f32 to vector<2x128xf32>
    %19 = arith.addf %18, %17 : vector<2x128xf32>
    %20 = arith.divf %18, %19 : vector<2x128xf32>
    %21 = math.tanh %15 : vector<2x128xf32>
    %22 = vector.extract_strided_slice %20 {offsets = [0, 0], sizes = [2, 32], strides = [1, 1]} : vector<2x128xf32> to vector<2x32xf32>
    %23 = vector.extract_strided_slice %20 {offsets = [0, 32], sizes = [2, 32], strides = [1, 1]} : vector<2x128xf32> to vector<2x32xf32>
    %24 = vector.extract_strided_slice %21 {offsets = [0, 64], sizes = [2, 32], strides = [1, 1]} : vector<2x128xf32> to vector<2x32xf32>
    %25 = vector.extract_strided_slice %20 {offsets = [0, 96], sizes = [2, 32], strides = [1, 1]} : vector<2x128xf32> to vector<2x32xf32>
    %26 = arith.mulf %23, %11 : vector<2x32xf32>
    %27 = arith.mulf %22, %24 : vector<2x32xf32>
    %28 = arith.addf %26, %27 : vector<2x32xf32>
    %29 = math.tanh %28 : vector<2x32xf32>
    %30 = arith.mulf %25, %29 : vector<2x32xf32>
    %31 = vector.extract_strided_slice %7 {offsets = [2, 0], sizes = [2, 128], strides = [1, 1]} : vector<16x128xf32> to vector<2x128xf32>
    %32 = arith.truncf %30 : vector<2x32xf32> to vector<2x32xbf16>
    %cst_13 = arith.constant dense<0.000000e+00> : vector<2x128xf32>
    %33 = tpu.matmul %32, %9, %cst_13 {dimension_numbers = #tpu.dot_dimension_numbers<[1], [0], [0], [1], [0, 0, 1, 1], [], []>} : vector<2x32xbf16>, vector<32x128xbf16>, vector<2x128xf32> -> vector<2x128xf32>
    %34 = arith.addf %31, %33 : vector<2x128xf32>
    %35 = arith.negf %34 : vector<2x128xf32>
    %36 = math.exp %35 : vector<2x128xf32>
    %cst_14 = arith.constant 1.000000e+00 : f32
    %37 = vector.broadcast %cst_14 : f32 to vector<2x128xf32>
    %38 = arith.addf %37, %36 : vector<2x128xf32>
    %39 = arith.divf %37, %38 : vector<2x128xf32>
    %40 = math.tanh %34 : vector<2x128xf32>
    %41 = vector.extract_strided_slice %39 {offsets = [0, 0], sizes = [2, 32], strides = [1, 1]} : vector<2x128xf32> to vector<2x32xf32>
    %42 = vector.extract_strided_slice %39 {offsets = [0, 32], sizes = [2, 32], strides = [1, 1]} : vector<2x128xf32> to vector<2x32xf32>
    %43 = vector.extract_strided_slice %40 {offsets = [0, 64], sizes = [2, 32], strides = [1, 1]} : vector<2x128xf32> to vector<2x32xf32>
    %44 = vector.extract_strided_slice %39 {offsets = [0, 96], sizes = [2, 32], strides = [1, 1]} : vector<2x128xf32> to vector<2x32xf32>
    %45 = arith.mulf %42, %28 : vector<2x32xf32>
    %46 = arith.mulf %41, %43 : vector<2x32xf32>
    %47 = arith.addf %45, %46 : vector<2x32xf32>
    %48 = math.tanh %47 : vector<2x32xf32>
    %49 = arith.mulf %44, %48 : vector<2x32xf32>
    %50 = vector.extract_strided_slice %7 {offsets = [4, 0], sizes = [2, 128], strides = [1, 1]} : vector<16x128xf32> to vector<2x128xf32>
    %51 = arith.truncf %49 : vector<2x32xf32> to vector<2x32xbf16>
    %cst_15 = arith.constant dense<0.000000e+00> : vector<2x128xf32>
    %52 = tpu.matmul %51, %9, %cst_15 {dimension_numbers = #tpu.dot_dimension_numbers<[1], [0], [0], [1], [0, 0, 1, 1], [], []>} : vector<2x32xbf16>, vector<32x128xbf16>, vector<2x128xf32> -> vector<2x128xf32>
    %53 = arith.addf %50, %52 : vector<2x128xf32>
    %54 = arith.negf %53 : vector<2x128xf32>
    %55 = math.exp %54 : vector<2x128xf32>
    %cst_16 = arith.constant 1.000000e+00 : f32
    %56 = vector.broadcast %cst_16 : f32 to vector<2x128xf32>
    %57 = arith.addf %56, %55 : vector<2x128xf32>
    %58 = arith.divf %56, %57 : vector<2x128xf32>
    %59 = math.tanh %53 : vector<2x128xf32>
    %60 = vector.extract_strided_slice %58 {offsets = [0, 0], sizes = [2, 32], strides = [1, 1]} : vector<2x128xf32> to vector<2x32xf32>
    %61 = vector.extract_strided_slice %58 {offsets = [0, 32], sizes = [2, 32], strides = [1, 1]} : vector<2x128xf32> to vector<2x32xf32>
    %62 = vector.extract_strided_slice %59 {offsets = [0, 64], sizes = [2, 32], strides = [1, 1]} : vector<2x128xf32> to vector<2x32xf32>
    %63 = vector.extract_strided_slice %58 {offsets = [0, 96], sizes = [2, 32], strides = [1, 1]} : vector<2x128xf32> to vector<2x32xf32>
    %64 = arith.mulf %61, %47 : vector<2x32xf32>
    %65 = arith.mulf %60, %62 : vector<2x32xf32>
    %66 = arith.addf %64, %65 : vector<2x32xf32>
    %67 = math.tanh %66 : vector<2x32xf32>
    %68 = arith.mulf %63, %67 : vector<2x32xf32>
    %69 = vector.extract_strided_slice %7 {offsets = [6, 0], sizes = [2, 128], strides = [1, 1]} : vector<16x128xf32> to vector<2x128xf32>
    %70 = arith.truncf %68 : vector<2x32xf32> to vector<2x32xbf16>
    %cst_17 = arith.constant dense<0.000000e+00> : vector<2x128xf32>
    %71 = tpu.matmul %70, %9, %cst_17 {dimension_numbers = #tpu.dot_dimension_numbers<[1], [0], [0], [1], [0, 0, 1, 1], [], []>} : vector<2x32xbf16>, vector<32x128xbf16>, vector<2x128xf32> -> vector<2x128xf32>
    %72 = arith.addf %69, %71 : vector<2x128xf32>
    %73 = arith.negf %72 : vector<2x128xf32>
    %74 = math.exp %73 : vector<2x128xf32>
    %cst_18 = arith.constant 1.000000e+00 : f32
    %75 = vector.broadcast %cst_18 : f32 to vector<2x128xf32>
    %76 = arith.addf %75, %74 : vector<2x128xf32>
    %77 = arith.divf %75, %76 : vector<2x128xf32>
    %78 = math.tanh %72 : vector<2x128xf32>
    %79 = vector.extract_strided_slice %77 {offsets = [0, 0], sizes = [2, 32], strides = [1, 1]} : vector<2x128xf32> to vector<2x32xf32>
    %80 = vector.extract_strided_slice %77 {offsets = [0, 32], sizes = [2, 32], strides = [1, 1]} : vector<2x128xf32> to vector<2x32xf32>
    %81 = vector.extract_strided_slice %78 {offsets = [0, 64], sizes = [2, 32], strides = [1, 1]} : vector<2x128xf32> to vector<2x32xf32>
    %82 = vector.extract_strided_slice %77 {offsets = [0, 96], sizes = [2, 32], strides = [1, 1]} : vector<2x128xf32> to vector<2x32xf32>
    %83 = arith.mulf %80, %66 : vector<2x32xf32>
    %84 = arith.mulf %79, %81 : vector<2x32xf32>
    %85 = arith.addf %83, %84 : vector<2x32xf32>
    %86 = math.tanh %85 : vector<2x32xf32>
    %87 = arith.mulf %82, %86 : vector<2x32xf32>
    %88 = vector.extract_strided_slice %7 {offsets = [8, 0], sizes = [2, 128], strides = [1, 1]} : vector<16x128xf32> to vector<2x128xf32>
    %89 = arith.truncf %87 : vector<2x32xf32> to vector<2x32xbf16>
    %cst_19 = arith.constant dense<0.000000e+00> : vector<2x128xf32>
    %90 = tpu.matmul %89, %9, %cst_19 {dimension_numbers = #tpu.dot_dimension_numbers<[1], [0], [0], [1], [0, 0, 1, 1], [], []>} : vector<2x32xbf16>, vector<32x128xbf16>, vector<2x128xf32> -> vector<2x128xf32>
    %91 = arith.addf %88, %90 : vector<2x128xf32>
    %92 = arith.negf %91 : vector<2x128xf32>
    %93 = math.exp %92 : vector<2x128xf32>
    %cst_20 = arith.constant 1.000000e+00 : f32
    %94 = vector.broadcast %cst_20 : f32 to vector<2x128xf32>
    %95 = arith.addf %94, %93 : vector<2x128xf32>
    %96 = arith.divf %94, %95 : vector<2x128xf32>
    %97 = math.tanh %91 : vector<2x128xf32>
    %98 = vector.extract_strided_slice %96 {offsets = [0, 0], sizes = [2, 32], strides = [1, 1]} : vector<2x128xf32> to vector<2x32xf32>
    %99 = vector.extract_strided_slice %96 {offsets = [0, 32], sizes = [2, 32], strides = [1, 1]} : vector<2x128xf32> to vector<2x32xf32>
    %100 = vector.extract_strided_slice %97 {offsets = [0, 64], sizes = [2, 32], strides = [1, 1]} : vector<2x128xf32> to vector<2x32xf32>
    %101 = vector.extract_strided_slice %96 {offsets = [0, 96], sizes = [2, 32], strides = [1, 1]} : vector<2x128xf32> to vector<2x32xf32>
    %102 = arith.mulf %99, %85 : vector<2x32xf32>
    %103 = arith.mulf %98, %100 : vector<2x32xf32>
    %104 = arith.addf %102, %103 : vector<2x32xf32>
    %105 = math.tanh %104 : vector<2x32xf32>
    %106 = arith.mulf %101, %105 : vector<2x32xf32>
    %107 = vector.extract_strided_slice %7 {offsets = [10, 0], sizes = [2, 128], strides = [1, 1]} : vector<16x128xf32> to vector<2x128xf32>
    %108 = arith.truncf %106 : vector<2x32xf32> to vector<2x32xbf16>
    %cst_21 = arith.constant dense<0.000000e+00> : vector<2x128xf32>
    %109 = tpu.matmul %108, %9, %cst_21 {dimension_numbers = #tpu.dot_dimension_numbers<[1], [0], [0], [1], [0, 0, 1, 1], [], []>} : vector<2x32xbf16>, vector<32x128xbf16>, vector<2x128xf32> -> vector<2x128xf32>
    %110 = arith.addf %107, %109 : vector<2x128xf32>
    %111 = arith.negf %110 : vector<2x128xf32>
    %112 = math.exp %111 : vector<2x128xf32>
    %cst_22 = arith.constant 1.000000e+00 : f32
    %113 = vector.broadcast %cst_22 : f32 to vector<2x128xf32>
    %114 = arith.addf %113, %112 : vector<2x128xf32>
    %115 = arith.divf %113, %114 : vector<2x128xf32>
    %116 = math.tanh %110 : vector<2x128xf32>
    %117 = vector.extract_strided_slice %115 {offsets = [0, 0], sizes = [2, 32], strides = [1, 1]} : vector<2x128xf32> to vector<2x32xf32>
    %118 = vector.extract_strided_slice %115 {offsets = [0, 32], sizes = [2, 32], strides = [1, 1]} : vector<2x128xf32> to vector<2x32xf32>
    %119 = vector.extract_strided_slice %116 {offsets = [0, 64], sizes = [2, 32], strides = [1, 1]} : vector<2x128xf32> to vector<2x32xf32>
    %120 = vector.extract_strided_slice %115 {offsets = [0, 96], sizes = [2, 32], strides = [1, 1]} : vector<2x128xf32> to vector<2x32xf32>
    %121 = arith.mulf %118, %104 : vector<2x32xf32>
    %122 = arith.mulf %117, %119 : vector<2x32xf32>
    %123 = arith.addf %121, %122 : vector<2x32xf32>
    %124 = math.tanh %123 : vector<2x32xf32>
    %125 = arith.mulf %120, %124 : vector<2x32xf32>
    %126 = vector.extract_strided_slice %7 {offsets = [12, 0], sizes = [2, 128], strides = [1, 1]} : vector<16x128xf32> to vector<2x128xf32>
    %127 = arith.truncf %125 : vector<2x32xf32> to vector<2x32xbf16>
    %cst_23 = arith.constant dense<0.000000e+00> : vector<2x128xf32>
    %128 = tpu.matmul %127, %9, %cst_23 {dimension_numbers = #tpu.dot_dimension_numbers<[1], [0], [0], [1], [0, 0, 1, 1], [], []>} : vector<2x32xbf16>, vector<32x128xbf16>, vector<2x128xf32> -> vector<2x128xf32>
    %129 = arith.addf %126, %128 : vector<2x128xf32>
    %130 = arith.negf %129 : vector<2x128xf32>
    %131 = math.exp %130 : vector<2x128xf32>
    %cst_24 = arith.constant 1.000000e+00 : f32
    %132 = vector.broadcast %cst_24 : f32 to vector<2x128xf32>
    %133 = arith.addf %132, %131 : vector<2x128xf32>
    %134 = arith.divf %132, %133 : vector<2x128xf32>
    %135 = math.tanh %129 : vector<2x128xf32>
    %136 = vector.extract_strided_slice %134 {offsets = [0, 0], sizes = [2, 32], strides = [1, 1]} : vector<2x128xf32> to vector<2x32xf32>
    %137 = vector.extract_strided_slice %134 {offsets = [0, 32], sizes = [2, 32], strides = [1, 1]} : vector<2x128xf32> to vector<2x32xf32>
    %138 = vector.extract_strided_slice %135 {offsets = [0, 64], sizes = [2, 32], strides = [1, 1]} : vector<2x128xf32> to vector<2x32xf32>
    %139 = vector.extract_strided_slice %134 {offsets = [0, 96], sizes = [2, 32], strides = [1, 1]} : vector<2x128xf32> to vector<2x32xf32>
    %140 = arith.mulf %137, %123 : vector<2x32xf32>
    %141 = arith.mulf %136, %138 : vector<2x32xf32>
    %142 = arith.addf %140, %141 : vector<2x32xf32>
    %143 = math.tanh %142 : vector<2x32xf32>
    %144 = arith.mulf %139, %143 : vector<2x32xf32>
    %145 = vector.extract_strided_slice %7 {offsets = [14, 0], sizes = [2, 128], strides = [1, 1]} : vector<16x128xf32> to vector<2x128xf32>
    %146 = arith.truncf %144 : vector<2x32xf32> to vector<2x32xbf16>
    %cst_25 = arith.constant dense<0.000000e+00> : vector<2x128xf32>
    %147 = tpu.matmul %146, %9, %cst_25 {dimension_numbers = #tpu.dot_dimension_numbers<[1], [0], [0], [1], [0, 0, 1, 1], [], []>} : vector<2x32xbf16>, vector<32x128xbf16>, vector<2x128xf32> -> vector<2x128xf32>
    %148 = arith.addf %145, %147 : vector<2x128xf32>
    %149 = arith.negf %148 : vector<2x128xf32>
    %150 = math.exp %149 : vector<2x128xf32>
    %cst_26 = arith.constant 1.000000e+00 : f32
    %151 = vector.broadcast %cst_26 : f32 to vector<2x128xf32>
    %152 = arith.addf %151, %150 : vector<2x128xf32>
    %153 = arith.divf %151, %152 : vector<2x128xf32>
    %154 = math.tanh %148 : vector<2x128xf32>
    %155 = vector.extract_strided_slice %153 {offsets = [0, 0], sizes = [2, 32], strides = [1, 1]} : vector<2x128xf32> to vector<2x32xf32>
    %156 = vector.extract_strided_slice %153 {offsets = [0, 32], sizes = [2, 32], strides = [1, 1]} : vector<2x128xf32> to vector<2x32xf32>
    %157 = vector.extract_strided_slice %154 {offsets = [0, 64], sizes = [2, 32], strides = [1, 1]} : vector<2x128xf32> to vector<2x32xf32>
    %158 = vector.extract_strided_slice %153 {offsets = [0, 96], sizes = [2, 32], strides = [1, 1]} : vector<2x128xf32> to vector<2x32xf32>
    %159 = arith.mulf %156, %142 : vector<2x32xf32>
    %160 = arith.mulf %155, %157 : vector<2x32xf32>
    %161 = arith.addf %159, %160 : vector<2x32xf32>
    %162 = math.tanh %161 : vector<2x32xf32>
    %163 = arith.mulf %158, %162 : vector<2x32xf32>
    %c1 = arith.constant 1 : index
    %c0_27 = arith.constant 0 : index
    %c0_28 = arith.constant 0 : index
    %164 = vector.load %arg3[%c1, %c0_27, %c0_28] : memref<2x32x128xbf16, #tpu.memory_space<vmem>>, vector<1x32x128xbf16>
    %165 = vector.shape_cast %164 : vector<1x32x128xbf16> to vector<32x128xbf16>
    %cst_29 = arith.constant 0.000000e+00 : f32
    %166 = vector.broadcast %cst_29 : f32 to vector<2x32xf32>
    %cst_30 = arith.constant 0.000000e+00 : f32
    %167 = vector.broadcast %cst_30 : f32 to vector<2x32xf32>
    %c1_31 = arith.constant 1 : index
    %c0_32 = arith.constant 0 : index
    %c0_33 = arith.constant 0 : index
    %168 = vector.load %arg2[%c1_31, %c0_32, %c0_33] : memref<3x32x128xbf16, #tpu.memory_space<vmem>>, vector<1x32x128xbf16>
    %169 = vector.shape_cast %168 : vector<1x32x128xbf16> to vector<32x128xbf16>
    %c1_34 = arith.constant 1 : index
    %c0_35 = arith.constant 0 : index
    %170 = vector.load %arg4[%c1_34, %c0_35] : memref<5x128xf32, #tpu.memory_space<vmem>>, vector<1x128xf32>
    %171 = arith.truncf %30 : vector<2x32xf32> to vector<2x32xbf16>
    %cst_36 = arith.constant dense<0.000000e+00> : vector<2x128xf32>
    %172 = tpu.matmul %171, %169, %cst_36 {dimension_numbers = #tpu.dot_dimension_numbers<[1], [0], [0], [1], [0, 0, 1, 1], [], []>} : vector<2x32xbf16>, vector<32x128xbf16>, vector<2x128xf32> -> vector<2x128xf32>
    %173 = vector.broadcast %170 : vector<1x128xf32> to vector<2x128xf32>
    %174 = arith.addf %172, %173 : vector<2x128xf32>
    %175 = arith.truncf %166 : vector<2x32xf32> to vector<2x32xbf16>
    %cst_37 = arith.constant dense<0.000000e+00> : vector<2x128xf32>
    %176 = tpu.matmul %175, %165, %cst_37 {dimension_numbers = #tpu.dot_dimension_numbers<[1], [0], [0], [1], [0, 0, 1, 1], [], []>} : vector<2x32xbf16>, vector<32x128xbf16>, vector<2x128xf32> -> vector<2x128xf32>
    %177 = arith.addf %174, %176 : vector<2x128xf32>
    %178 = arith.negf %177 : vector<2x128xf32>
    %179 = math.exp %178 : vector<2x128xf32>
    %cst_38 = arith.constant 1.000000e+00 : f32
    %180 = vector.broadcast %cst_38 : f32 to vector<2x128xf32>
    %181 = arith.addf %180, %179 : vector<2x128xf32>
    %182 = arith.divf %180, %181 : vector<2x128xf32>
    %183 = math.tanh %177 : vector<2x128xf32>
    %184 = vector.extract_strided_slice %182 {offsets = [0, 0], sizes = [2, 32], strides = [1, 1]} : vector<2x128xf32> to vector<2x32xf32>
    %185 = vector.extract_strided_slice %182 {offsets = [0, 32], sizes = [2, 32], strides = [1, 1]} : vector<2x128xf32> to vector<2x32xf32>
    %186 = vector.extract_strided_slice %183 {offsets = [0, 64], sizes = [2, 32], strides = [1, 1]} : vector<2x128xf32> to vector<2x32xf32>
    %187 = vector.extract_strided_slice %182 {offsets = [0, 96], sizes = [2, 32], strides = [1, 1]} : vector<2x128xf32> to vector<2x32xf32>
    %188 = arith.mulf %185, %167 : vector<2x32xf32>
    %189 = arith.mulf %184, %186 : vector<2x32xf32>
    %190 = arith.addf %188, %189 : vector<2x32xf32>
    %191 = math.tanh %190 : vector<2x32xf32>
    %192 = arith.mulf %187, %191 : vector<2x32xf32>
    %193 = arith.truncf %49 : vector<2x32xf32> to vector<2x32xbf16>
    %cst_39 = arith.constant dense<0.000000e+00> : vector<2x128xf32>
    %194 = tpu.matmul %193, %169, %cst_39 {dimension_numbers = #tpu.dot_dimension_numbers<[1], [0], [0], [1], [0, 0, 1, 1], [], []>} : vector<2x32xbf16>, vector<32x128xbf16>, vector<2x128xf32> -> vector<2x128xf32>
    %195 = vector.broadcast %170 : vector<1x128xf32> to vector<2x128xf32>
    %196 = arith.addf %194, %195 : vector<2x128xf32>
    %197 = arith.truncf %192 : vector<2x32xf32> to vector<2x32xbf16>
    %cst_40 = arith.constant dense<0.000000e+00> : vector<2x128xf32>
    %198 = tpu.matmul %197, %165, %cst_40 {dimension_numbers = #tpu.dot_dimension_numbers<[1], [0], [0], [1], [0, 0, 1, 1], [], []>} : vector<2x32xbf16>, vector<32x128xbf16>, vector<2x128xf32> -> vector<2x128xf32>
    %199 = arith.addf %196, %198 : vector<2x128xf32>
    %200 = arith.negf %199 : vector<2x128xf32>
    %201 = math.exp %200 : vector<2x128xf32>
    %cst_41 = arith.constant 1.000000e+00 : f32
    %202 = vector.broadcast %cst_41 : f32 to vector<2x128xf32>
    %203 = arith.addf %202, %201 : vector<2x128xf32>
    %204 = arith.divf %202, %203 : vector<2x128xf32>
    %205 = math.tanh %199 : vector<2x128xf32>
    %206 = vector.extract_strided_slice %204 {offsets = [0, 0], sizes = [2, 32], strides = [1, 1]} : vector<2x128xf32> to vector<2x32xf32>
    %207 = vector.extract_strided_slice %204 {offsets = [0, 32], sizes = [2, 32], strides = [1, 1]} : vector<2x128xf32> to vector<2x32xf32>
    %208 = vector.extract_strided_slice %205 {offsets = [0, 64], sizes = [2, 32], strides = [1, 1]} : vector<2x128xf32> to vector<2x32xf32>
    %209 = vector.extract_strided_slice %204 {offsets = [0, 96], sizes = [2, 32], strides = [1, 1]} : vector<2x128xf32> to vector<2x32xf32>
    %210 = arith.mulf %207, %190 : vector<2x32xf32>
    %211 = arith.mulf %206, %208 : vector<2x32xf32>
    %212 = arith.addf %210, %211 : vector<2x32xf32>
    %213 = math.tanh %212 : vector<2x32xf32>
    %214 = arith.mulf %209, %213 : vector<2x32xf32>
    %215 = arith.truncf %68 : vector<2x32xf32> to vector<2x32xbf16>
    %cst_42 = arith.constant dense<0.000000e+00> : vector<2x128xf32>
    %216 = tpu.matmul %215, %169, %cst_42 {dimension_numbers = #tpu.dot_dimension_numbers<[1], [0], [0], [1], [0, 0, 1, 1], [], []>} : vector<2x32xbf16>, vector<32x128xbf16>, vector<2x128xf32> -> vector<2x128xf32>
    %217 = vector.broadcast %170 : vector<1x128xf32> to vector<2x128xf32>
    %218 = arith.addf %216, %217 : vector<2x128xf32>
    %219 = arith.truncf %214 : vector<2x32xf32> to vector<2x32xbf16>
    %cst_43 = arith.constant dense<0.000000e+00> : vector<2x128xf32>
    %220 = tpu.matmul %219, %165, %cst_43 {dimension_numbers = #tpu.dot_dimension_numbers<[1], [0], [0], [1], [0, 0, 1, 1], [], []>} : vector<2x32xbf16>, vector<32x128xbf16>, vector<2x128xf32> -> vector<2x128xf32>
    %221 = arith.addf %218, %220 : vector<2x128xf32>
    %222 = arith.negf %221 : vector<2x128xf32>
    %223 = math.exp %222 : vector<2x128xf32>
    %cst_44 = arith.constant 1.000000e+00 : f32
    %224 = vector.broadcast %cst_44 : f32 to vector<2x128xf32>
    %225 = arith.addf %224, %223 : vector<2x128xf32>
    %226 = arith.divf %224, %225 : vector<2x128xf32>
    %227 = math.tanh %221 : vector<2x128xf32>
    %228 = vector.extract_strided_slice %226 {offsets = [0, 0], sizes = [2, 32], strides = [1, 1]} : vector<2x128xf32> to vector<2x32xf32>
    %229 = vector.extract_strided_slice %226 {offsets = [0, 32], sizes = [2, 32], strides = [1, 1]} : vector<2x128xf32> to vector<2x32xf32>
    %230 = vector.extract_strided_slice %227 {offsets = [0, 64], sizes = [2, 32], strides = [1, 1]} : vector<2x128xf32> to vector<2x32xf32>
    %231 = vector.extract_strided_slice %226 {offsets = [0, 96], sizes = [2, 32], strides = [1, 1]} : vector<2x128xf32> to vector<2x32xf32>
    %232 = arith.mulf %229, %212 : vector<2x32xf32>
    %233 = arith.mulf %228, %230 : vector<2x32xf32>
    %234 = arith.addf %232, %233 : vector<2x32xf32>
    %235 = math.tanh %234 : vector<2x32xf32>
    %236 = arith.mulf %231, %235 : vector<2x32xf32>
    %237 = arith.truncf %87 : vector<2x32xf32> to vector<2x32xbf16>
    %cst_45 = arith.constant dense<0.000000e+00> : vector<2x128xf32>
    %238 = tpu.matmul %237, %169, %cst_45 {dimension_numbers = #tpu.dot_dimension_numbers<[1], [0], [0], [1], [0, 0, 1, 1], [], []>} : vector<2x32xbf16>, vector<32x128xbf16>, vector<2x128xf32> -> vector<2x128xf32>
    %239 = vector.broadcast %170 : vector<1x128xf32> to vector<2x128xf32>
    %240 = arith.addf %238, %239 : vector<2x128xf32>
    %241 = arith.truncf %236 : vector<2x32xf32> to vector<2x32xbf16>
    %cst_46 = arith.constant dense<0.000000e+00> : vector<2x128xf32>
    %242 = tpu.matmul %241, %165, %cst_46 {dimension_numbers = #tpu.dot_dimension_numbers<[1], [0], [0], [1], [0, 0, 1, 1], [], []>} : vector<2x32xbf16>, vector<32x128xbf16>, vector<2x128xf32> -> vector<2x128xf32>
    %243 = arith.addf %240, %242 : vector<2x128xf32>
    %244 = arith.negf %243 : vector<2x128xf32>
    %245 = math.exp %244 : vector<2x128xf32>
    %cst_47 = arith.constant 1.000000e+00 : f32
    %246 = vector.broadcast %cst_47 : f32 to vector<2x128xf32>
    %247 = arith.addf %246, %245 : vector<2x128xf32>
    %248 = arith.divf %246, %247 : vector<2x128xf32>
    %249 = math.tanh %243 : vector<2x128xf32>
    %250 = vector.extract_strided_slice %248 {offsets = [0, 0], sizes = [2, 32], strides = [1, 1]} : vector<2x128xf32> to vector<2x32xf32>
    %251 = vector.extract_strided_slice %248 {offsets = [0, 32], sizes = [2, 32], strides = [1, 1]} : vector<2x128xf32> to vector<2x32xf32>
    %252 = vector.extract_strided_slice %249 {offsets = [0, 64], sizes = [2, 32], strides = [1, 1]} : vector<2x128xf32> to vector<2x32xf32>
    %253 = vector.extract_strided_slice %248 {offsets = [0, 96], sizes = [2, 32], strides = [1, 1]} : vector<2x128xf32> to vector<2x32xf32>
    %254 = arith.mulf %251, %234 : vector<2x32xf32>
    %255 = arith.mulf %250, %252 : vector<2x32xf32>
    %256 = arith.addf %254, %255 : vector<2x32xf32>
    %257 = math.tanh %256 : vector<2x32xf32>
    %258 = arith.mulf %253, %257 : vector<2x32xf32>
    %259 = arith.truncf %106 : vector<2x32xf32> to vector<2x32xbf16>
    %cst_48 = arith.constant dense<0.000000e+00> : vector<2x128xf32>
    %260 = tpu.matmul %259, %169, %cst_48 {dimension_numbers = #tpu.dot_dimension_numbers<[1], [0], [0], [1], [0, 0, 1, 1], [], []>} : vector<2x32xbf16>, vector<32x128xbf16>, vector<2x128xf32> -> vector<2x128xf32>
    %261 = vector.broadcast %170 : vector<1x128xf32> to vector<2x128xf32>
    %262 = arith.addf %260, %261 : vector<2x128xf32>
    %263 = arith.truncf %258 : vector<2x32xf32> to vector<2x32xbf16>
    %cst_49 = arith.constant dense<0.000000e+00> : vector<2x128xf32>
    %264 = tpu.matmul %263, %165, %cst_49 {dimension_numbers = #tpu.dot_dimension_numbers<[1], [0], [0], [1], [0, 0, 1, 1], [], []>} : vector<2x32xbf16>, vector<32x128xbf16>, vector<2x128xf32> -> vector<2x128xf32>
    %265 = arith.addf %262, %264 : vector<2x128xf32>
    %266 = arith.negf %265 : vector<2x128xf32>
    %267 = math.exp %266 : vector<2x128xf32>
    %cst_50 = arith.constant 1.000000e+00 : f32
    %268 = vector.broadcast %cst_50 : f32 to vector<2x128xf32>
    %269 = arith.addf %268, %267 : vector<2x128xf32>
    %270 = arith.divf %268, %269 : vector<2x128xf32>
    %271 = math.tanh %265 : vector<2x128xf32>
    %272 = vector.extract_strided_slice %270 {offsets = [0, 0], sizes = [2, 32], strides = [1, 1]} : vector<2x128xf32> to vector<2x32xf32>
    %273 = vector.extract_strided_slice %270 {offsets = [0, 32], sizes = [2, 32], strides = [1, 1]} : vector<2x128xf32> to vector<2x32xf32>
    %274 = vector.extract_strided_slice %271 {offsets = [0, 64], sizes = [2, 32], strides = [1, 1]} : vector<2x128xf32> to vector<2x32xf32>
    %275 = vector.extract_strided_slice %270 {offsets = [0, 96], sizes = [2, 32], strides = [1, 1]} : vector<2x128xf32> to vector<2x32xf32>
    %276 = arith.mulf %273, %256 : vector<2x32xf32>
    %277 = arith.mulf %272, %274 : vector<2x32xf32>
    %278 = arith.addf %276, %277 : vector<2x32xf32>
    %279 = math.tanh %278 : vector<2x32xf32>
    %280 = arith.mulf %275, %279 : vector<2x32xf32>
    %281 = arith.truncf %125 : vector<2x32xf32> to vector<2x32xbf16>
    %cst_51 = arith.constant dense<0.000000e+00> : vector<2x128xf32>
    %282 = tpu.matmul %281, %169, %cst_51 {dimension_numbers = #tpu.dot_dimension_numbers<[1], [0], [0], [1], [0, 0, 1, 1], [], []>} : vector<2x32xbf16>, vector<32x128xbf16>, vector<2x128xf32> -> vector<2x128xf32>
    %283 = vector.broadcast %170 : vector<1x128xf32> to vector<2x128xf32>
    %284 = arith.addf %282, %283 : vector<2x128xf32>
    %285 = arith.truncf %280 : vector<2x32xf32> to vector<2x32xbf16>
    %cst_52 = arith.constant dense<0.000000e+00> : vector<2x128xf32>
    %286 = tpu.matmul %285, %165, %cst_52 {dimension_numbers = #tpu.dot_dimension_numbers<[1], [0], [0], [1], [0, 0, 1, 1], [], []>} : vector<2x32xbf16>, vector<32x128xbf16>, vector<2x128xf32> -> vector<2x128xf32>
    %287 = arith.addf %284, %286 : vector<2x128xf32>
    %288 = arith.negf %287 : vector<2x128xf32>
    %289 = math.exp %288 : vector<2x128xf32>
    %cst_53 = arith.constant 1.000000e+00 : f32
    %290 = vector.broadcast %cst_53 : f32 to vector<2x128xf32>
    %291 = arith.addf %290, %289 : vector<2x128xf32>
    %292 = arith.divf %290, %291 : vector<2x128xf32>
    %293 = math.tanh %287 : vector<2x128xf32>
    %294 = vector.extract_strided_slice %292 {offsets = [0, 0], sizes = [2, 32], strides = [1, 1]} : vector<2x128xf32> to vector<2x32xf32>
    %295 = vector.extract_strided_slice %292 {offsets = [0, 32], sizes = [2, 32], strides = [1, 1]} : vector<2x128xf32> to vector<2x32xf32>
    %296 = vector.extract_strided_slice %293 {offsets = [0, 64], sizes = [2, 32], strides = [1, 1]} : vector<2x128xf32> to vector<2x32xf32>
    %297 = vector.extract_strided_slice %292 {offsets = [0, 96], sizes = [2, 32], strides = [1, 1]} : vector<2x128xf32> to vector<2x32xf32>
    %298 = arith.mulf %295, %278 : vector<2x32xf32>
    %299 = arith.mulf %294, %296 : vector<2x32xf32>
    %300 = arith.addf %298, %299 : vector<2x32xf32>
    %301 = math.tanh %300 : vector<2x32xf32>
    %302 = arith.mulf %297, %301 : vector<2x32xf32>
    %303 = arith.truncf %144 : vector<2x32xf32> to vector<2x32xbf16>
    %cst_54 = arith.constant dense<0.000000e+00> : vector<2x128xf32>
    %304 = tpu.matmul %303, %169, %cst_54 {dimension_numbers = #tpu.dot_dimension_numbers<[1], [0], [0], [1], [0, 0, 1, 1], [], []>} : vector<2x32xbf16>, vector<32x128xbf16>, vector<2x128xf32> -> vector<2x128xf32>
    %305 = vector.broadcast %170 : vector<1x128xf32> to vector<2x128xf32>
    %306 = arith.addf %304, %305 : vector<2x128xf32>
    %307 = arith.truncf %302 : vector<2x32xf32> to vector<2x32xbf16>
    %cst_55 = arith.constant dense<0.000000e+00> : vector<2x128xf32>
    %308 = tpu.matmul %307, %165, %cst_55 {dimension_numbers = #tpu.dot_dimension_numbers<[1], [0], [0], [1], [0, 0, 1, 1], [], []>} : vector<2x32xbf16>, vector<32x128xbf16>, vector<2x128xf32> -> vector<2x128xf32>
    %309 = arith.addf %306, %308 : vector<2x128xf32>
    %310 = arith.negf %309 : vector<2x128xf32>
    %311 = math.exp %310 : vector<2x128xf32>
    %cst_56 = arith.constant 1.000000e+00 : f32
    %312 = vector.broadcast %cst_56 : f32 to vector<2x128xf32>
    %313 = arith.addf %312, %311 : vector<2x128xf32>
    %314 = arith.divf %312, %313 : vector<2x128xf32>
    %315 = math.tanh %309 : vector<2x128xf32>
    %316 = vector.extract_strided_slice %314 {offsets = [0, 0], sizes = [2, 32], strides = [1, 1]} : vector<2x128xf32> to vector<2x32xf32>
    %317 = vector.extract_strided_slice %314 {offsets = [0, 32], sizes = [2, 32], strides = [1, 1]} : vector<2x128xf32> to vector<2x32xf32>
    %318 = vector.extract_strided_slice %315 {offsets = [0, 64], sizes = [2, 32], strides = [1, 1]} : vector<2x128xf32> to vector<2x32xf32>
    %319 = vector.extract_strided_slice %314 {offsets = [0, 96], sizes = [2, 32], strides = [1, 1]} : vector<2x128xf32> to vector<2x32xf32>
    %320 = arith.mulf %317, %300 : vector<2x32xf32>
    %321 = arith.mulf %316, %318 : vector<2x32xf32>
    %322 = arith.addf %320, %321 : vector<2x32xf32>
    %323 = math.tanh %322 : vector<2x32xf32>
    %324 = arith.mulf %319, %323 : vector<2x32xf32>
    %325 = arith.truncf %163 : vector<2x32xf32> to vector<2x32xbf16>
    %cst_57 = arith.constant dense<0.000000e+00> : vector<2x128xf32>
    %326 = tpu.matmul %325, %169, %cst_57 {dimension_numbers = #tpu.dot_dimension_numbers<[1], [0], [0], [1], [0, 0, 1, 1], [], []>} : vector<2x32xbf16>, vector<32x128xbf16>, vector<2x128xf32> -> vector<2x128xf32>
    %327 = vector.broadcast %170 : vector<1x128xf32> to vector<2x128xf32>
    %328 = arith.addf %326, %327 : vector<2x128xf32>
    %329 = arith.truncf %324 : vector<2x32xf32> to vector<2x32xbf16>
    %cst_58 = arith.constant dense<0.000000e+00> : vector<2x128xf32>
    %330 = tpu.matmul %329, %165, %cst_58 {dimension_numbers = #tpu.dot_dimension_numbers<[1], [0], [0], [1], [0, 0, 1, 1], [], []>} : vector<2x32xbf16>, vector<32x128xbf16>, vector<2x128xf32> -> vector<2x128xf32>
    %331 = arith.addf %328, %330 : vector<2x128xf32>
    %332 = arith.negf %331 : vector<2x128xf32>
    %333 = math.exp %332 : vector<2x128xf32>
    %cst_59 = arith.constant 1.000000e+00 : f32
    %334 = vector.broadcast %cst_59 : f32 to vector<2x128xf32>
    %335 = arith.addf %334, %333 : vector<2x128xf32>
    %336 = arith.divf %334, %335 : vector<2x128xf32>
    %337 = math.tanh %331 : vector<2x128xf32>
    %338 = vector.extract_strided_slice %336 {offsets = [0, 0], sizes = [2, 32], strides = [1, 1]} : vector<2x128xf32> to vector<2x32xf32>
    %339 = vector.extract_strided_slice %336 {offsets = [0, 32], sizes = [2, 32], strides = [1, 1]} : vector<2x128xf32> to vector<2x32xf32>
    %340 = vector.extract_strided_slice %337 {offsets = [0, 64], sizes = [2, 32], strides = [1, 1]} : vector<2x128xf32> to vector<2x32xf32>
    %341 = vector.extract_strided_slice %336 {offsets = [0, 96], sizes = [2, 32], strides = [1, 1]} : vector<2x128xf32> to vector<2x32xf32>
    %342 = arith.mulf %339, %322 : vector<2x32xf32>
    %343 = arith.mulf %338, %340 : vector<2x32xf32>
    %344 = arith.addf %342, %343 : vector<2x32xf32>
    %345 = math.tanh %344 : vector<2x32xf32>
    %346 = arith.mulf %341, %345 : vector<2x32xf32>
    %cst_60 = arith.constant 0.000000e+00 : f32
    %347 = vector.broadcast %cst_60 : f32 to vector<1x32xf32>
    %cst_61 = arith.constant dense<0.000000e+00> : vector<32xf32>
    %348 = vector.multi_reduction <add>, %192, %cst_61 [0] : vector<2x32xf32> to vector<32xf32>
    %349 = vector.shape_cast %348 : vector<32xf32> to vector<1x32xf32>
    %350 = arith.addf %347, %349 : vector<1x32xf32>
    %cst_62 = arith.constant dense<0.000000e+00> : vector<32xf32>
    %351 = vector.multi_reduction <add>, %214, %cst_62 [0] : vector<2x32xf32> to vector<32xf32>
    %352 = vector.shape_cast %351 : vector<32xf32> to vector<1x32xf32>
    %353 = arith.addf %350, %352 : vector<1x32xf32>
    %cst_63 = arith.constant dense<0.000000e+00> : vector<32xf32>
    %354 = vector.multi_reduction <add>, %236, %cst_63 [0] : vector<2x32xf32> to vector<32xf32>
    %355 = vector.shape_cast %354 : vector<32xf32> to vector<1x32xf32>
    %356 = arith.addf %353, %355 : vector<1x32xf32>
    %cst_64 = arith.constant dense<0.000000e+00> : vector<32xf32>
    %357 = vector.multi_reduction <add>, %258, %cst_64 [0] : vector<2x32xf32> to vector<32xf32>
    %358 = vector.shape_cast %357 : vector<32xf32> to vector<1x32xf32>
    %359 = arith.addf %356, %358 : vector<1x32xf32>
    %cst_65 = arith.constant dense<0.000000e+00> : vector<32xf32>
    %360 = vector.multi_reduction <add>, %280, %cst_65 [0] : vector<2x32xf32> to vector<32xf32>
    %361 = vector.shape_cast %360 : vector<32xf32> to vector<1x32xf32>
    %362 = arith.addf %359, %361 : vector<1x32xf32>
    %cst_66 = arith.constant dense<0.000000e+00> : vector<32xf32>
    %363 = vector.multi_reduction <add>, %302, %cst_66 [0] : vector<2x32xf32> to vector<32xf32>
    %364 = vector.shape_cast %363 : vector<32xf32> to vector<1x32xf32>
    %365 = arith.addf %362, %364 : vector<1x32xf32>
    %cst_67 = arith.constant dense<0.000000e+00> : vector<32xf32>
    %366 = vector.multi_reduction <add>, %324, %cst_67 [0] : vector<2x32xf32> to vector<32xf32>
    %367 = vector.shape_cast %366 : vector<32xf32> to vector<1x32xf32>
    %368 = arith.addf %365, %367 : vector<1x32xf32>
    %cst_68 = arith.constant dense<0.000000e+00> : vector<32xf32>
    %369 = vector.multi_reduction <add>, %346, %cst_68 [0] : vector<2x32xf32> to vector<32xf32>
    %370 = vector.shape_cast %369 : vector<32xf32> to vector<1x32xf32>
    %371 = arith.addf %368, %370 : vector<1x32xf32>
    %cst_69 = arith.constant 6.250000e-02 : f32
    %372 = vector.broadcast %cst_69 : f32 to vector<1x32xf32>
    %373 = arith.mulf %371, %372 : vector<1x32xf32>
    %cst_70 = arith.constant 0.000000e+00 : f32
    %374 = vector.broadcast %cst_70 : f32 to vector<1x32xf32>
    %375 = vector.broadcast %373 : vector<1x32xf32> to vector<2x32xf32>
    %376 = arith.subf %192, %375 : vector<2x32xf32>
    %377 = arith.mulf %376, %376 : vector<2x32xf32>
    %cst_71 = arith.constant dense<0.000000e+00> : vector<32xf32>
    %378 = vector.multi_reduction <add>, %377, %cst_71 [0] : vector<2x32xf32> to vector<32xf32>
    %379 = vector.shape_cast %378 : vector<32xf32> to vector<1x32xf32>
    %380 = arith.addf %374, %379 : vector<1x32xf32>
    %381 = vector.broadcast %373 : vector<1x32xf32> to vector<2x32xf32>
    %382 = arith.subf %214, %381 : vector<2x32xf32>
    %383 = arith.mulf %382, %382 : vector<2x32xf32>
    %cst_72 = arith.constant dense<0.000000e+00> : vector<32xf32>
    %384 = vector.multi_reduction <add>, %383, %cst_72 [0] : vector<2x32xf32> to vector<32xf32>
    %385 = vector.shape_cast %384 : vector<32xf32> to vector<1x32xf32>
    %386 = arith.addf %380, %385 : vector<1x32xf32>
    %387 = vector.broadcast %373 : vector<1x32xf32> to vector<2x32xf32>
    %388 = arith.subf %236, %387 : vector<2x32xf32>
    %389 = arith.mulf %388, %388 : vector<2x32xf32>
    %cst_73 = arith.constant dense<0.000000e+00> : vector<32xf32>
    %390 = vector.multi_reduction <add>, %389, %cst_73 [0] : vector<2x32xf32> to vector<32xf32>
    %391 = vector.shape_cast %390 : vector<32xf32> to vector<1x32xf32>
    %392 = arith.addf %386, %391 : vector<1x32xf32>
    %393 = vector.broadcast %373 : vector<1x32xf32> to vector<2x32xf32>
    %394 = arith.subf %258, %393 : vector<2x32xf32>
    %395 = arith.mulf %394, %394 : vector<2x32xf32>
    %cst_74 = arith.constant dense<0.000000e+00> : vector<32xf32>
    %396 = vector.multi_reduction <add>, %395, %cst_74 [0] : vector<2x32xf32> to vector<32xf32>
    %397 = vector.shape_cast %396 : vector<32xf32> to vector<1x32xf32>
    %398 = arith.addf %392, %397 : vector<1x32xf32>
    %399 = vector.broadcast %373 : vector<1x32xf32> to vector<2x32xf32>
    %400 = arith.subf %280, %399 : vector<2x32xf32>
    %401 = arith.mulf %400, %400 : vector<2x32xf32>
    %cst_75 = arith.constant dense<0.000000e+00> : vector<32xf32>
    %402 = vector.multi_reduction <add>, %401, %cst_75 [0] : vector<2x32xf32> to vector<32xf32>
    %403 = vector.shape_cast %402 : vector<32xf32> to vector<1x32xf32>
    %404 = arith.addf %398, %403 : vector<1x32xf32>
    %405 = vector.broadcast %373 : vector<1x32xf32> to vector<2x32xf32>
    %406 = arith.subf %302, %405 : vector<2x32xf32>
    %407 = arith.mulf %406, %406 : vector<2x32xf32>
    %cst_76 = arith.constant dense<0.000000e+00> : vector<32xf32>
    %408 = vector.multi_reduction <add>, %407, %cst_76 [0] : vector<2x32xf32> to vector<32xf32>
    %409 = vector.shape_cast %408 : vector<32xf32> to vector<1x32xf32>
    %410 = arith.addf %404, %409 : vector<1x32xf32>
    %411 = vector.broadcast %373 : vector<1x32xf32> to vector<2x32xf32>
    %412 = arith.subf %324, %411 : vector<2x32xf32>
    %413 = arith.mulf %412, %412 : vector<2x32xf32>
    %cst_77 = arith.constant dense<0.000000e+00> : vector<32xf32>
    %414 = vector.multi_reduction <add>, %413, %cst_77 [0] : vector<2x32xf32> to vector<32xf32>
    %415 = vector.shape_cast %414 : vector<32xf32> to vector<1x32xf32>
    %416 = arith.addf %410, %415 : vector<1x32xf32>
    %417 = vector.broadcast %373 : vector<1x32xf32> to vector<2x32xf32>
    %418 = arith.subf %346, %417 : vector<2x32xf32>
    %419 = arith.mulf %418, %418 : vector<2x32xf32>
    %cst_78 = arith.constant dense<0.000000e+00> : vector<32xf32>
    %420 = vector.multi_reduction <add>, %419, %cst_78 [0] : vector<2x32xf32> to vector<32xf32>
    %421 = vector.shape_cast %420 : vector<32xf32> to vector<1x32xf32>
    %422 = arith.addf %416, %421 : vector<1x32xf32>
    %cst_79 = arith.constant 6.250000e-02 : f32
    %423 = vector.broadcast %cst_79 : f32 to vector<1x32xf32>
    %424 = arith.mulf %422, %423 : vector<1x32xf32>
    %c2 = arith.constant 2 : index
    %c0_80 = arith.constant 0 : index
    %425 = vector.load %arg4[%c2, %c0_80] : memref<5x128xf32, #tpu.memory_space<vmem>>, vector<1x32xf32>
    %c3 = arith.constant 3 : index
    %c0_81 = arith.constant 0 : index
    %426 = vector.load %arg4[%c3, %c0_81] : memref<5x128xf32, #tpu.memory_space<vmem>>, vector<1x32xf32>
    %427 = vector.broadcast %373 : vector<1x32xf32> to vector<2x32xf32>
    %428 = arith.subf %346, %427 : vector<2x32xf32>
    %cst_82 = arith.constant 9.99999974E-6 : f32
    %429 = vector.broadcast %cst_82 : f32 to vector<1x32xf32>
    %430 = arith.addf %424, %429 : vector<1x32xf32>
    %431 = math.rsqrt %430 : vector<1x32xf32>
    %432 = vector.broadcast %431 : vector<1x32xf32> to vector<2x32xf32>
    %433 = arith.mulf %428, %432 : vector<2x32xf32>
    %434 = vector.broadcast %425 : vector<1x32xf32> to vector<2x32xf32>
    %435 = arith.mulf %433, %434 : vector<2x32xf32>
    %436 = vector.broadcast %426 : vector<1x32xf32> to vector<2x32xf32>
    %437 = arith.addf %435, %436 : vector<2x32xf32>
    %cst_83 = arith.constant 0.000000e+00 : f32
    %438 = vector.broadcast %cst_83 : f32 to vector<2x32xf32>
    %439 = arith.maximumf %437, %438 : vector<2x32xf32>
    %c2_84 = arith.constant 2 : index
    %c0_85 = arith.constant 0 : index
    %c0_86 = arith.constant 0 : index
    %440 = vector.load %arg2[%c2_84, %c0_85, %c0_86] : memref<3x32x128xbf16, #tpu.memory_space<vmem>>, vector<1x32x128xbf16>
    %441 = vector.shape_cast %440 : vector<1x32x128xbf16> to vector<32x128xbf16>
    %442 = arith.truncf %439 : vector<2x32xf32> to vector<2x32xbf16>
    %cst_87 = arith.constant dense<0.000000e+00> : vector<2x128xf32>
    %443 = tpu.matmul %442, %441, %cst_87 {dimension_numbers = #tpu.dot_dimension_numbers<[1], [0], [0], [1], [0, 0, 1, 1], [], []>} : vector<2x32xbf16>, vector<32x128xbf16>, vector<2x128xf32> -> vector<2x128xf32>
    %c4 = arith.constant 4 : index
    %c0_88 = arith.constant 0 : index
    %444 = vector.load %arg4[%c4, %c0_88] : memref<5x128xf32, #tpu.memory_space<vmem>>, vector<1x8xf32>
    %445 = vector.extract_strided_slice %443 {offsets = [0, 0], sizes = [2, 8], strides = [1, 1]} : vector<2x128xf32> to vector<2x8xf32>
    %446 = vector.broadcast %444 : vector<1x8xf32> to vector<2x8xf32>
    %447 = arith.addf %445, %446 : vector<2x8xf32>
    %c0_89 = arith.constant 0 : index
    %c0_90 = arith.constant 0 : index
    %448 = vector.load %arg5[%c0_89, %c0_90] : memref<2x8xf32, #tpu.memory_space<vmem>>, vector<2x8xf32>
    tpu.vector_store %arg5[%c0_89, %c0_90], %447 {strides = array<i32>} : memref<2x8xf32, #tpu.memory_space<vmem>>, vector<2x8xf32>,
    return
  }
  func.func @transform_0(%arg0: i32) -> (i32, i32) {
    %c0_i32 = arith.constant 0 : i32
    %c0_i32_0 = arith.constant 0 : i32
    %c0_i32_1 = arith.constant 0 : i32
    return %c0_i32, %c0_i32_0 : i32, i32
  }
  func.func @transform_1(%arg0: i32) -> (i32, i32, i32) {
    %c0_i32 = arith.constant 0 : i32
    %c0_i32_0 = arith.constant 0 : i32
    %c0_i32_1 = arith.constant 0 : i32
    %c0_i32_2 = arith.constant 0 : i32
    return %c0_i32, %c0_i32_0, %c0_i32_1 : i32, i32, i32
  }
  func.func @transform_2(%arg0: i32) -> (i32, i32, i32) {
    %c0_i32 = arith.constant 0 : i32
    %c0_i32_0 = arith.constant 0 : i32
    %c0_i32_1 = arith.constant 0 : i32
    %c0_i32_2 = arith.constant 0 : i32
    return %c0_i32, %c0_i32_0, %c0_i32_1 : i32, i32, i32
  }
  func.func @transform_3(%arg0: i32) -> (i32, i32) {
    %c0_i32 = arith.constant 0 : i32
    %c0_i32_0 = arith.constant 0 : i32
    %c0_i32_1 = arith.constant 0 : i32
    return %c0_i32, %c0_i32_0 : i32, i32
  }
  func.func @transform_4(%arg0: i32) -> (i32, i32) {
    %c0_i32 = arith.constant 0 : i32
    %c0_i32_0 = arith.constant 0 : i32
    %c0_i32_1 = arith.constant 0 : i32
    return %c0_i32, %c0_i32_0 : i32, i32
  }
}

</mosaic_0001>

<llo_original>
// kernel: lstm_cluster_forward.1
$region0: #{lstm_cluster_forward.1}
  #allocation0 [shape = 'u32[]', space=smem, size = 0x4, offset = 0x4, fixed_abs, tag = 'smem constant byte address 0x4 - core index']
  #allocation1 [shape = 'u32[144,128]{1,0:T(1,128)}', space=vmem, size = 0x12000, scoped, tag = 'internal scratch']
  %s0 = inlined_call_operand.vmem [shape: f32[16,8], index: 0, kind: input, shape index: {}]
  %s1 = inlined_call_operand.hbm [shape: bf16[3,32,128], index: 1, kind: input, shape index: {}]
  %s2 = inlined_call_operand.vmem [shape: bf16[2,32,128], index: 2, kind: input, shape index: {}]
  %s3 = inlined_call_operand.vmem [shape: f32[5,128], index: 3, kind: input, shape index: {}]
  %s4 = inlined_call_operand.hbm [shape: f32[2,8], index: 4, kind: output, shape index: {}]
  %s5 = sld [smem:[#allocation0]]
  $region30: #{lstm_cluster_forward.1} parent=0
    _
  %s7 = ssub.s32 1, %s5
  %s8 = scalar_select 0, %s7, %s5
  $region1: #{lstm_cluster_forward.1} parent=0
    #allocation2 [shape = 'u8[24576]{0}', space=vmem, size = 0x6000, scoped, tag = 'input window, operand 1, single buffered']
    #allocation3 [shape = 's32[1]{0}', space=sflag, size = 0x4, scoped, tag = 'scoped memory for lstm_cluster_forward.1']
    #allocation4 [shape = 's32[1]{0}', space=sflag, size = 0x4, scoped, tag = 'scoped memory for lstm_cluster_forward.1']
    #allocation5 [shape = 'u8[1024]{0}', space=vmem, size = 0x400, scoped, tag = 'output window, operand 0, single buffered']
    %9 = vsyncpa [#allocation3], 0
    %10 = vsyncpa [#allocation4], 0
    // Predicated region
    $region2: #{lstm_cluster_forward.1} parent=1 // pred_check
      _
    $region3: #{lstm_cluster_forward.1} parent=1 // pred_check_branch
      %12 = sbr.rel (0) target = $region5
    $region4: #{lstm_cluster_forward.1} parent=1 // pred_region
      _
    $region5: #{lstm_cluster_forward.1} parent=1 // pred_fallthru
      _
    // Predicated region
    $region6: #{lstm_cluster_forward.1} parent=1 // pred_check
      _
    $region7: #{lstm_cluster_forward.1} parent=1 // pred_check_branch
      %14 = sbr.rel (0) target = $region9
    $region8: #{lstm_cluster_forward.1} parent=1 // pred_region
      %s16 = ssub.s32 768, 768
      %17 = vsyncadd [#allocation3], %s16
      %s18 = sshll.u32 [#allocation2], 4
      %s19 = int_to_ptr.vmem [resolvable:$true] %s18
      %24 = dma.hbm_to_vmem [thread:$0]  %s1, 768, %s19, [#allocation3], 64, 64, 4
    $region9: #{lstm_cluster_forward.1} parent=1 // pred_fallthru
      _
    // Predicated region
    $region10: #{lstm_cluster_forward.1} parent=1 // pred_check
      _
    $region11: #{lstm_cluster_forward.1} parent=1 // pred_check_branch
      %26 = sbr.rel (0) target = $region13
    $region12: #{lstm_cluster_forward.1} parent=1 // pred_region
      _
    $region13: #{lstm_cluster_forward.1} parent=1 // pred_fallthru
      _
    // Predicated region
    $region14: #{lstm_cluster_forward.1} parent=1 // pred_check
      _
    $region15: #{lstm_cluster_forward.1} parent=1 // pred_check_branch
      %28 = sbr.rel (0) target = $region17
    $region16: #{lstm_cluster_forward.1} parent=1 // pred_region
      _
    $region17: #{lstm_cluster_forward.1} parent=1 // pred_fallthru
      _
    // Predicated region
    $region18: #{lstm_cluster_forward.1} parent=1 // pred_check
      _
    $region19: #{lstm_cluster_forward.1} parent=1 // pred_check_branch
      %30 = sbr.rel (0) target = $region21
    $region20: #{lstm_cluster_forward.1} parent=1 // pred_region
      %31 = dma.done [#allocation3], 768
    $region21: #{lstm_cluster_forward.1} parent=1 // pred_fallthru
      _
    %v33 = vld [vmem:[#allocation2] sm:$0xf]
    %v34 = vld [vmem:[%s3] sm:$0x1]
    %v35 = vld [vmem:[%s0] sm:$0xff]
    %v36 = vld [vmem:[%s0 + $0x8] sm:$0xff]
    %v37 = vpack.c.bf16 %v36, %v35
    %v38 = vlaneseq
    %v39 = vshrl.u32 %v38, 7
    %v40 = vsub.s32 0, %v39
    %v41 = vrot.slane %v34, %v40
    %vm42 = vcmask 64512
    %v44 = vsel %vm42, %v37, 0
    %vm46 = vcmask 1043456
    %v48 = vsel %vm46, %v33, 0
    %50 = vmatprep.subr.bf16.mxu0 0
    %51 = vmatpush1.bf16.msra.mxu0 %v48
    %52 = vmatprep.subr.bf16.mxu0 0
    %53 = vmatpush1.bf16.msra.mxu0 0
    %54 = vmatprep.subr.bf16.mxu0 0
    %55 = vmatpush1.bf16.msra.mxu0 0
    %56 = vmatprep.subr.bf16.mxu0 0
    %57 = vmatpush1.bf16.msra.mxu0 0
    %58 = vmatprep.subr.bf16.mxu0 0
    %59 = vmatpush1.bf16.msra.mxu0 0
    %60 = vmatprep.subr.bf16.mxu0 0
    %61 = vmatpush1.bf16.msra.mxu0 0
    %62 = vmatprep.subr.bf16.mxu0 0
    %63 = vmatpush1.bf16.msra.mxu0 0
    %64 = vmatprep.subr.bf16.mxu0 0
    %65 = vmatpush1.bf16.msra.mxu0 0
    %66 = vmatprep.subr.bf16.mxu0 0
    %67 = vmatpush1.bf16.msra.mxu0 0
    %68 = vmatprep.subr.bf16.mxu0 0
    %69 = vmatpush1.bf16.msra.mxu0 0
    %70 = vmatprep.subr.bf16.mxu0 0
    %71 = vmatpush1.bf16.msra.mxu0 0
    %72 = vmatprep.subr.bf16.mxu0 0
    %73 = vmatpush1.bf16.msra.mxu0 0
    %74 = vmatprep.subr.bf16.mxu0 0
    %75 = vmatpush1.bf16.msra.mxu0 0
    %76 = vmatprep.subr.bf16.mxu0 0
    %77 = vmatpush1.bf16.msra.mxu0 0
    %78 = vmatprep.subr.bf16.mxu0 0
    %79 = vmatpush1.bf16.msra.mxu0 0
    %80 = vmatprep.subr.bf16.mxu0 0
    %81 = vmatpush1.bf16.msra.mxu0 0
    %82 = vmatprep.mubr.bf16.mxu0 0
    %83 = vmatmul.mubr.bf16.gmra.mrb[0].mxu0 %v44
    %v84 = vpop.f32.mrb[0].mxu0
    %v85 = vadd.f32 %v41, %v84
    %v86 = vpop.f32.mrb[0].mxu0
    %v87 = vpop.f32.mrb[0].mxu0
    %v88 = vadd.f32 %v41, %v87
    %v89 = vpop.f32.mrb[0].mxu0
    %90 = vdwg.mxu0
    %v91 = vld [vmem:[%s2] sm:$0xf]
    %v92 = vld [vmem:[%s2 + $0x4] sm:$0xf]
    %v93 = vld [vmem:[%s2 + $0x8] sm:$0xf]
    %v94 = vld [vmem:[%s2 + $0xc] sm:$0xf]
    %v99 = vunpack.c.l.b16 %v91
    %v100 = vunpack.c.l.b16 %v92
    %v101 = vunpack.c.l.b16 %v93
    %v102 = vunpack.c.l.b16 %v94
    %v103 = vpack.c.b16 %v100, %v99
    %v104 = vpack.c.b16 %v102, %v101
    %vm107 = vcmask 261120
    %v109 = vsel %vm107, 0, 0
    %111 = vmatprep.subr.bf16.mxu0 0
    %112 = vmatpush1.bf16.msra.mxu0 %v103
    %113 = vmatprep.subr.bf16.mxu0 0
    %114 = vmatpush1.bf16.msra.mxu0 %v104
    %115 = vmatprep.subr.bf16.mxu0 0
    %116 = vmatpush1.bf16.msra.mxu0 0
    %117 = vmatprep.subr.bf16.mxu0 0
    %118 = vmatpush1.bf16.msra.mxu0 0
    %119 = vmatprep.subr.bf16.mxu0 0
    %120 = vmatpush1.bf16.msra.mxu0 0
    %121 = vmatprep.subr.bf16.mxu0 0
    %122 = vmatpush1.bf16.msra.mxu0 0
    %123 = vmatprep.subr.bf16.mxu0 0
    %124 = vmatpush1.bf16.msra.mxu0 0
    %125 = vmatprep.subr.bf16.mxu0 0
    %126 = vmatpush1.bf16.msra.mxu0 0
    %127 = vmatprep.subr.bf16.mxu0 0
    %128 = vmatpush1.bf16.msra.mxu0 0
    %129 = vmatprep.subr.bf16.mxu0 0
    %130 = vmatpush1.bf16.msra.mxu0 0
    %131 = vmatprep.subr.bf16.mxu0 0
    %132 = vmatpush1.bf16.msra.mxu0 0
    %133 = vmatprep.subr.bf16.mxu0 0
    %134 = vmatpush1.bf16.msra.mxu0 0
    %135 = vmatprep.subr.bf16.mxu0 0
    %136 = vmatpush1.bf16.msra.mxu0 0
    %137 = vmatprep.subr.bf16.mxu0 0
    %138 = vmatpush1.bf16.msra.mxu0 0
    %139 = vmatprep.subr.bf16.mxu0 0
    %140 = vmatpush1.bf16.msra.mxu0 0
    %141 = vmatprep.subr.bf16.mxu0 0
    %142 = vmatpush1.bf16.msra.mxu0 0
    %143 = vmatprep.mubr.bf16.mxu0 0
    %144 = vmatmul.mubr.bf16.gmra.mrb[0].mxu0 %v109
    %v145 = vpop.f32.mrb[0].mxu0
    %v146 = vadd.f32 0.0, %v145
    %v147 = vpop.f32.mrb[0].mxu0
    %v148 = vpop.f32.mrb[0].mxu0
    %v149 = vpop.f32.mrb[0].mxu0
    %150 = vdwg.mxu0
    %v151 = vadd.f32 %v85, %v146
    %v152 = vxor.u32 %v151, 2147483648
    %v153 = vmul.f32 %v152, 1.442695
    %v154 = vpow.pop %v153
    %v155 = vadd.f32 %v154, 1.0
    %v156 = vrcp.pop %v155
    %v157 = vmul.f32 1.0, %v156
    %v158 = vtanh.pop %v151
    %v159 = vmul.f32 %v157, 0.0
    %161 = vrot.lane.b32.xlu0 %v158, 64
    %v162 = vpop.permute.xlu0 %161
    %v164 = vmul.f32 %v157, %v162
    %166 = vrot.lane.b32.xlu0 %v164, 32
    %v167 = vpop.permute.xlu0 %166
    %v169 = vadd.f32 %v159, %v167
    %v170 = vtanh.pop %v169
    %172 = vrot.lane.b32.xlu0 %v170, 64
    %v173 = vpop.permute.xlu0 %172
    %v175 = vmul.f32 %v157, %v173
    %v176 = vpack.c.bf16 %v175, %v175
    %178 = vrot.lane.b32.xlu0 %v176, 32
    %v179 = vpop.permute.xlu0 %178
    %v181 = vsel %vm107, %v179, 0
    %183 = vmatprep.subr.bf16.mxu0 0
    %184 = vmatpush1.bf16.msra.mxu0 %v103
    %185 = vmatprep.subr.bf16.mxu0 0
    %186 = vmatpush1.bf16.msra.mxu0 %v104
    %187 = vmatprep.subr.bf16.mxu0 0
    %188 = vmatpush1.bf16.msra.mxu0 0
    %189 = vmatprep.subr.bf16.mxu0 0
    %190 = vmatpush1.bf16.msra.mxu0 0
    %191 = vmatprep.subr.bf16.mxu0 0
    %192 = vmatpush1.bf16.msra.mxu0 0
    %193 = vmatprep.subr.bf16.mxu0 0
    %194 = vmatpush1.bf16.msra.mxu0 0
    %195 = vmatprep.subr.bf16.mxu0 0
    %196 = vmatpush1.bf16.msra.mxu0 0
    %197 = vmatprep.subr.bf16.mxu0 0
    %198 = vmatpush1.bf16.msra.mxu0 0
    %199 = vmatprep.subr.bf16.mxu0 0
    %200 = vmatpush1.bf16.msra.mxu0 0
    %201 = vmatprep.subr.bf16.mxu0 0
    %202 = vmatpush1.bf16.msra.mxu0 0
    %203 = vmatprep.subr.bf16.mxu0 0
    %204 = vmatpush1.bf16.msra.mxu0 0
    %205 = vmatprep.subr.bf16.mxu0 0
    %206 = vmatpush1.bf16.msra.mxu0 0
    %207 = vmatprep.subr.bf16.mxu0 0
    %208 = vmatpush1.bf16.msra.mxu0 0
    %209 = vmatprep.subr.bf16.mxu0 0
    %210 = vmatpush1.bf16.msra.mxu0 0
    %211 = vmatprep.subr.bf16.mxu0 0
    %212 = vmatpush1.bf16.msra.mxu0 0
    %213 = vmatprep.subr.bf16.mxu0 0
    %214 = vmatpush1.bf16.msra.mxu0 0
    %215 = vmatprep.mubr.bf16.mxu0 0
    %216 = vmatmul.mubr.bf16.gmra.mrb[0].mxu0 %v181
    %v217 = vpop.f32.mrb[0].mxu0
    %v218 = vadd.f32 0.0, %v217
    %v219 = vpop.f32.mrb[0].mxu0
    %v220 = vpop.f32.mrb[0].mxu0
    %v221 = vpop.f32.mrb[0].mxu0
    %222 = vdwg.mxu0
    %v224 = vrot.slane %v218, 6
    %v226 = vadd.f32 %v85, %v224
    %v227 = vxor.u32 %v226, 2147483648
    %v228 = vmul.f32 %v227, 1.442695
    %v229 = vpow.pop %v228
    %v230 = vadd.f32 %v229, 1.0
    %v231 = vrcp.pop %v230
    %v232 = vmul.f32 1.0, %v231
    %v233 = vtanh.pop %v226
    %v235 = vrot.slane %v169, 6
    %v237 = vmul.f32 %v232, %v235
    %239 = vrot.lane.b32.xlu0 %v233, 64
    %v240 = vpop.permute.xlu0 %239
    %v242 = vmul.f32 %v232, %v240
    %244 = vrot.lane.b32.xlu0 %v242, 32
    %v245 = vpop.permute.xlu0 %244
    %v247 = vadd.f32 %v237, %v245
    %v248 = vtanh.pop %v247
    %250 = vrot.lane.b32.xlu0 %v248, 64
    %v251 = vpop.permute.xlu0 %250
    %v253 = vmul.f32 %v232, %v251
    %v254 = vpack.c.bf16 %v253, %v253
    %v256 = vrot.slane %v254, 1
    %257 = vrot.lane.b32.xlu0 %v256, 32
    %v258 = vpop.permute.xlu0 %257
    %v260 = vsel %vm107, %v258, 0
    %262 = vmatprep.subr.bf16.mxu0 0
    %263 = vmatpush1.bf16.msra.mxu0 %v103
    %264 = vmatprep.subr.bf16.mxu0 0
    %265 = vmatpush1.bf16.msra.mxu0 %v104
    %266 = vmatprep.subr.bf16.mxu0 0
    %267 = vmatpush1.bf16.msra.mxu0 0
    %268 = vmatprep.subr.bf16.mxu0 0
    %269 = vmatpush1.bf16.msra.mxu0 0
    %270 = vmatprep.subr.bf16.mxu0 0
    %271 = vmatpush1.bf16.msra.mxu0 0
    %272 = vmatprep.subr.bf16.mxu0 0
    %273 = vmatpush1.bf16.msra.mxu0 0
    %274 = vmatprep.subr.bf16.mxu0 0
    %275 = vmatpush1.bf16.msra.mxu0 0
    %276 = vmatprep.subr.bf16.mxu0 0
    %277 = vmatpush1.bf16.msra.mxu0 0
    %278 = vmatprep.subr.bf16.mxu0 0
    %279 = vmatpush1.bf16.msra.mxu0 0
    %280 = vmatprep.subr.bf16.mxu0 0
    %281 = vmatpush1.bf16.msra.mxu0 0
    %282 = vmatprep.subr.bf16.mxu0 0
    %283 = vmatpush1.bf16.msra.mxu0 0
    %284 = vmatprep.subr.bf16.mxu0 0
    %285 = vmatpush1.bf16.msra.mxu0 0
    %286 = vmatprep.subr.bf16.mxu0 0
    %287 = vmatpush1.bf16.msra.mxu0 0
    %288 = vmatprep.subr.bf16.mxu0 0
    %289 = vmatpush1.bf16.msra.mxu0 0
    %290 = vmatprep.subr.bf16.mxu0 0
    %291 = vmatpush1.bf16.msra.mxu0 0
    %292 = vmatprep.subr.bf16.mxu0 0
    %293 = vmatpush1.bf16.msra.mxu0 0
    %294 = vmatprep.mubr.bf16.mxu0 0
    %295 = vmatmul.mubr.bf16.gmra.mrb[0].mxu0 %v260
    %v296 = vpop.f32.mrb[0].mxu0
    %v297 = vadd.f32 0.0, %v296
    %v298 = vpop.f32.mrb[0].mxu0
    %v299 = vpop.f32.mrb[0].mxu0
    %v300 = vpop.f32.mrb[0].mxu0
    %301 = vdwg.mxu0
    %v303 = vrot.slane %v297, 4
    %v305 = vadd.f32 %v85, %v303
    %v306 = vxor.u32 %v305, 2147483648
    %v307 = vmul.f32 %v306, 1.442695
    %v308 = vpow.pop %v307
    %v309 = vadd.f32 %v308, 1.0
    %v310 = vrcp.pop %v309
    %v311 = vmul.f32 1.0, %v310
    %v312 = vtanh.pop %v305
    %v314 = vrot.slane %v247, 6
    %v316 = vmul.f32 %v311, %v314
    %318 = vrot.lane.b32.xlu0 %v312, 64
    %v319 = vpop.permute.xlu0 %318
    %v321 = vmul.f32 %v311, %v319
    %323 = vrot.lane.b32.xlu0 %v321, 32
    %v324 = vpop.permute.xlu0 %323
    %v326 = vadd.f32 %v316, %v324
    %v327 = vtanh.pop %v326
    %329 = vrot.lane.b32.xlu0 %v327, 64
    %v330 = vpop.permute.xlu0 %329
    %v332 = vmul.f32 %v311, %v330
    %v333 = vpack.c.bf16 %v332, %v332
    %v335 = vrot.slane %v333, 2
    %336 = vrot.lane.b32.xlu0 %v335, 32
    %v337 = vpop.permute.xlu0 %336
    %v339 = vsel %vm107, %v337, 0
    %341 = vmatprep.subr.bf16.mxu0 0
    %342 = vmatpush1.bf16.msra.mxu0 %v103
    %343 = vmatprep.subr.bf16.mxu0 0
    %344 = vmatpush1.bf16.msra.mxu0 %v104
    %345 = vmatprep.subr.bf16.mxu0 0
    %346 = vmatpush1.bf16.msra.mxu0 0
    %347 = vmatprep.subr.bf16.mxu0 0
    %348 = vmatpush1.bf16.msra.mxu0 0
    %349 = vmatprep.subr.bf16.mxu0 0
    %350 = vmatpush1.bf16.msra.mxu0 0
    %351 = vmatprep.subr.bf16.mxu0 0
    %352 = vmatpush1.bf16.msra.mxu0 0
    %353 = vmatprep.subr.bf16.mxu0 0
    %354 = vmatpush1.bf16.msra.mxu0 0
    %355 = vmatprep.subr.bf16.mxu0 0
    %356 = vmatpush1.bf16.msra.mxu0 0
    %357 = vmatprep.subr.bf16.mxu0 0
    %358 = vmatpush1.bf16.msra.mxu0 0
    %359 = vmatprep.subr.bf16.mxu0 0
    %360 = vmatpush1.bf16.msra.mxu0 0
    %361 = vmatprep.subr.bf16.mxu0 0
    %362 = vmatpush1.bf16.msra.mxu0 0
    %363 = vmatprep.subr.bf16.mxu0 0
    %364 = vmatpush1.bf16.msra.mxu0 0
    %365 = vmatprep.subr.bf16.mxu0 0
    %366 = vmatpush1.bf16.msra.mxu0 0
    %367 = vmatprep.subr.bf16.mxu0 0
    %368 = vmatpush1.bf16.msra.mxu0 0
    %369 = vmatprep.subr.bf16.mxu0 0
    %370 = vmatpush1.bf16.msra.mxu0 0
    %371 = vmatprep.subr.bf16.mxu0 0
    %372 = vmatpush1.bf16.msra.mxu0 0
    %373 = vmatprep.mubr.bf16.mxu0 0
    %374 = vmatmul.mubr.bf16.gmra.mrb[0].mxu0 %v339
    %v375 = vpop.f32.mrb[0].mxu0
    %v376 = vadd.f32 0.0, %v375
    %v377 = vpop.f32.mrb[0].mxu0
    %v378 = vpop.f32.mrb[0].mxu0
    %v379 = vpop.f32.mrb[0].mxu0
    %380 = vdwg.mxu0
    %v382 = vrot.slane %v376, 2
    %v384 = vadd.f32 %v85, %v382
    %v385 = vxor.u32 %v384, 2147483648
    %v386 = vmul.f32 %v385, 1.442695
    %v387 = vpow.pop %v386
    %v388 = vadd.f32 %v387, 1.0
    %v389 = vrcp.pop %v388
    %v390 = vmul.f32 1.0, %v389
    %v391 = vtanh.pop %v384
    %v393 = vrot.slane %v326, 6
    %v395 = vmul.f32 %v390, %v393
    %397 = vrot.lane.b32.xlu0 %v391, 64
    %v398 = vpop.permute.xlu0 %397
    %v400 = vmul.f32 %v390, %v398
    %402 = vrot.lane.b32.xlu0 %v400, 32
    %v403 = vpop.permute.xlu0 %402
    %v405 = vadd.f32 %v395, %v403
    %v406 = vtanh.pop %v405
    %408 = vrot.lane.b32.xlu0 %v406, 64
    %v409 = vpop.permute.xlu0 %408
    %v411 = vmul.f32 %v390, %v409
    %v412 = vpack.c.bf16 %v411, %v411
    %v414 = vrot.slane %v412, 3
    %415 = vrot.lane.b32.xlu0 %v414, 32
    %v416 = vpop.permute.xlu0 %415
    %v418 = vsel %vm107, %v416, 0
    %420 = vmatprep.subr.bf16.mxu0 0
    %421 = vmatpush1.bf16.msra.mxu0 %v103
    %422 = vmatprep.subr.bf16.mxu0 0
    %423 = vmatpush1.bf16.msra.mxu0 %v104
    %424 = vmatprep.subr.bf16.mxu0 0
    %425 = vmatpush1.bf16.msra.mxu0 0
    %426 = vmatprep.subr.bf16.mxu0 0
    %427 = vmatpush1.bf16.msra.mxu0 0
    %428 = vmatprep.subr.bf16.mxu0 0
    %429 = vmatpush1.bf16.msra.mxu0 0
    %430 = vmatprep.subr.bf16.mxu0 0
    %431 = vmatpush1.bf16.msra.mxu0 0
    %432 = vmatprep.subr.bf16.mxu0 0
    %433 = vmatpush1.bf16.msra.mxu0 0
    %434 = vmatprep.subr.bf16.mxu0 0
    %435 = vmatpush1.bf16.msra.mxu0 0
    %436 = vmatprep.subr.bf16.mxu0 0
    %437 = vmatpush1.bf16.msra.mxu0 0
    %438 = vmatprep.subr.bf16.mxu0 0
    %439 = vmatpush1.bf16.msra.mxu0 0
    %440 = vmatprep.subr.bf16.mxu0 0
    %441 = vmatpush1.bf16.msra.mxu0 0
    %442 = vmatprep.subr.bf16.mxu0 0
    %443 = vmatpush1.bf16.msra.mxu0 0
    %444 = vmatprep.subr.bf16.mxu0 0
    %445 = vmatpush1.bf16.msra.mxu0 0
    %446 = vmatprep.subr.bf16.mxu0 0
    %447 = vmatpush1.bf16.msra.mxu0 0
    %448 = vmatprep.subr.bf16.mxu0 0
    %449 = vmatpush1.bf16.msra.mxu0 0
    %450 = vmatprep.subr.bf16.mxu0 0
    %451 = vmatpush1.bf16.msra.mxu0 0
    %452 = vmatprep.mubr.bf16.mxu0 0
    %453 = vmatmul.mubr.bf16.gmra.mrb[0].mxu0 %v418
    %v454 = vpop.f32.mrb[0].mxu0
    %v455 = vadd.f32 0.0, %v454
    %v456 = vpop.f32.mrb[0].mxu0
    %v457 = vpop.f32.mrb[0].mxu0
    %v458 = vpop.f32.mrb[0].mxu0
    %459 = vdwg.mxu0
    %v460 = vadd.f32 %v88, %v455
    %v461 = vxor.u32 %v460, 2147483648
    %v462 = vmul.f32 %v461, 1.442695
    %v463 = vpow.pop %v462
    %v464 = vadd.f32 %v463, 1.0
    %v465 = vrcp.pop %v464
    %v466 = vmul.f32 1.0, %v465
    %v467 = vtanh.pop %v460
    %v469 = vrot.slane %v405, 6
    %v471 = vmul.f32 %v466, %v469
    %473 = vrot.lane.b32.xlu0 %v467, 64
    %v474 = vpop.permute.xlu0 %473
    %v476 = vmul.f32 %v466, %v474
    %478 = vrot.lane.b32.xlu0 %v476, 32
    %v479 = vpop.permute.xlu0 %478
    %v481 = vadd.f32 %v471, %v479
    %v482 = vtanh.pop %v481
    %484 = vrot.lane.b32.xlu0 %v482, 64
    %v485 = vpop.permute.xlu0 %484
    %v487 = vmul.f32 %v466, %v485
    %v488 = vpack.c.bf16 %v487, %v487
    %490 = vrot.lane.b32.xlu0 %v488, 32
    %v491 = vpop.permute.xlu0 %490
    %v493 = vsel %vm107, %v491, 0
    %495 = vmatprep.subr.bf16.mxu0 0
    %496 = vmatpush1.bf16.msra.mxu0 %v103
    %497 = vmatprep.subr.bf16.mxu0 0
    %498 = vmatpush1.bf16.msra.mxu0 %v104
    %499 = vmatprep.subr.bf16.mxu0 0
    %500 = vmatpush1.bf16.msra.mxu0 0
    %501 = vmatprep.subr.bf16.mxu0 0
    %502 = vmatpush1.bf16.msra.mxu0 0
    %503 = vmatprep.subr.bf16.mxu0 0
    %504 = vmatpush1.bf16.msra.mxu0 0
    %505 = vmatprep.subr.bf16.mxu0 0
    %506 = vmatpush1.bf16.msra.mxu0 0
    %507 = vmatprep.subr.bf16.mxu0 0
    %508 = vmatpush1.bf16.msra.mxu0 0
    %509 = vmatprep.subr.bf16.mxu0 0
    %510 = vmatpush1.bf16.msra.mxu0 0
    %511 = vmatprep.subr.bf16.mxu0 0
    %512 = vmatpush1.bf16.msra.mxu0 0
    %513 = vmatprep.subr.bf16.mxu0 0
    %514 = vmatpush1.bf16.msra.mxu0 0
    %515 = vmatprep.subr.bf16.mxu0 0
    %516 = vmatpush1.bf16.msra.mxu0 0
    %517 = vmatprep.subr.bf16.mxu0 0
    %518 = vmatpush1.bf16.msra.mxu0 0
    %519 = vmatprep.subr.bf16.mxu0 0
    %520 = vmatpush1.bf16.msra.mxu0 0
    %521 = vmatprep.subr.bf16.mxu0 0
    %522 = vmatpush1.bf16.msra.mxu0 0
    %523 = vmatprep.subr.bf16.mxu0 0
    %524 = vmatpush1.bf16.msra.mxu0 0
    %525 = vmatprep.subr.bf16.mxu0 0
    %526 = vmatpush1.bf16.msra.mxu0 0
    %527 = vmatprep.mubr.bf16.mxu0 0
    %528 = vmatmul.mubr.bf16.gmra.mrb[0].mxu0 %v493
    %v529 = vpop.f32.mrb[0].mxu0
    %v530 = vadd.f32 0.0, %v529
    %v531 = vpop.f32.mrb[0].mxu0
    %v532 = vpop.f32.mrb[0].mxu0
    %v533 = vpop.f32.mrb[0].mxu0
    %534 = vdwg.mxu0
    %v536 = vrot.slane %v530, 6
    %v538 = vadd.f32 %v88, %v536
    %v539 = vxor.u32 %v538, 2147483648
    %v540 = vmul.f32 %v539, 1.442695
    %v541 = vpow.pop %v540
    %v542 = vadd.f32 %v541, 1.0
    %v543 = vrcp.pop %v542
    %v544 = vmul.f32 1.0, %v543
    %v545 = vtanh.pop %v538
    %v547 = vrot.slane %v481, 6
    %v549 = vmul.f32 %v544, %v547
    %551 = vrot.lane.b32.xlu0 %v545, 64
    %v552 = vpop.permute.xlu0 %551
    %v554 = vmul.f32 %v544, %v552
    %556 = vrot.lane.b32.xlu0 %v554, 32
    %v557 = vpop.permute.xlu0 %556
    %v559 = vadd.f32 %v549, %v557
    %v560 = vtanh.pop %v559
    %562 = vrot.lane.b32.xlu0 %v560, 64
    %v563 = vpop.permute.xlu0 %562
    %v565 = vmul.f32 %v544, %v563
    %v566 = vpack.c.bf16 %v565, %v565
    %v568 = vrot.slane %v566, 1
    %569 = vrot.lane.b32.xlu0 %v568, 32
    %v570 = vpop.permute.xlu0 %569
    %v572 = vsel %vm107, %v570, 0
    %574 = vmatprep.subr.bf16.mxu0 0
    %575 = vmatpush1.bf16.msra.mxu0 %v103
    %576 = vmatprep.subr.bf16.mxu0 0
    %577 = vmatpush1.bf16.msra.mxu0 %v104
    %578 = vmatprep.subr.bf16.mxu0 0
    %579 = vmatpush1.bf16.msra.mxu0 0
    %580 = vmatprep.subr.bf16.mxu0 0
    %581 = vmatpush1.bf16.msra.mxu0 0
    %582 = vmatprep.subr.bf16.mxu0 0
    %583 = vmatpush1.bf16.msra.mxu0 0
    %584 = vmatprep.subr.bf16.mxu0 0
    %585 = vmatpush1.bf16.msra.mxu0 0
    %586 = vmatprep.subr.bf16.mxu0 0
    %587 = vmatpush1.bf16.msra.mxu0 0
    %588 = vmatprep.subr.bf16.mxu0 0
    %589 = vmatpush1.bf16.msra.mxu0 0
    %590 = vmatprep.subr.bf16.mxu0 0
    %591 = vmatpush1.bf16.msra.mxu0 0
    %592 = vmatprep.subr.bf16.mxu0 0
    %593 = vmatpush1.bf16.msra.mxu0 0
    %594 = vmatprep.subr.bf16.mxu0 0
    %595 = vmatpush1.bf16.msra.mxu0 0
    %596 = vmatprep.subr.bf16.mxu0 0
    %597 = vmatpush1.bf16.msra.mxu0 0
    %598 = vmatprep.subr.bf16.mxu0 0
    %599 = vmatpush1.bf16.msra.mxu0 0
    %600 = vmatprep.subr.bf16.mxu0 0
    %601 = vmatpush1.bf16.msra.mxu0 0
    %602 = vmatprep.subr.bf16.mxu0 0
    %603 = vmatpush1.bf16.msra.mxu0 0
    %604 = vmatprep.subr.bf16.mxu0 0
    %605 = vmatpush1.bf16.msra.mxu0 0
    %606 = vmatprep.mubr.bf16.mxu0 0
    %607 = vmatmul.mubr.bf16.gmra.mrb[0].mxu0 %v572
    %v608 = vpop.f32.mrb[0].mxu0
    %v609 = vadd.f32 0.0, %v608
    %v610 = vpop.f32.mrb[0].mxu0
    %v611 = vpop.f32.mrb[0].mxu0
    %v612 = vpop.f32.mrb[0].mxu0
    %613 = vdwg.mxu0
    %v615 = vrot.slane %v609, 4
    %v617 = vadd.f32 %v88, %v615
    %v618 = vxor.u32 %v617, 2147483648
    %v619 = vmul.f32 %v618, 1.442695
    %v620 = vpow.pop %v619
    %v621 = vadd.f32 %v620, 1.0
    %v622 = vrcp.pop %v621
    %v623 = vmul.f32 1.0, %v622
    %v624 = vtanh.pop %v617
    %v626 = vrot.slane %v559, 6
    %v628 = vmul.f32 %v623, %v626
    %630 = vrot.lane.b32.xlu0 %v624, 64
    %v631 = vpop.permute.xlu0 %630
    %v633 = vmul.f32 %v623, %v631
    %635 = vrot.lane.b32.xlu0 %v633, 32
    %v636 = vpop.permute.xlu0 %635
    %v638 = vadd.f32 %v628, %v636
    %v639 = vtanh.pop %v638
    %641 = vrot.lane.b32.xlu0 %v639, 64
    %v642 = vpop.permute.xlu0 %641
    %v644 = vmul.f32 %v623, %v642
    %v645 = vpack.c.bf16 %v644, %v644
    %v647 = vrot.slane %v645, 2
    %648 = vrot.lane.b32.xlu0 %v647, 32
    %v649 = vpop.permute.xlu0 %648
    %v651 = vsel %vm107, %v649, 0
    %653 = vmatprep.subr.bf16.mxu0 0
    %654 = vmatpush1.bf16.msra.mxu0 %v103
    %655 = vmatprep.subr.bf16.mxu0 0
    %656 = vmatpush1.bf16.msra.mxu0 %v104
    %657 = vmatprep.subr.bf16.mxu0 0
    %658 = vmatpush1.bf16.msra.mxu0 0
    %659 = vmatprep.subr.bf16.mxu0 0
    %660 = vmatpush1.bf16.msra.mxu0 0
    %661 = vmatprep.subr.bf16.mxu0 0
    %662 = vmatpush1.bf16.msra.mxu0 0
    %663 = vmatprep.subr.bf16.mxu0 0
    %664 = vmatpush1.bf16.msra.mxu0 0
    %665 = vmatprep.subr.bf16.mxu0 0
    %666 = vmatpush1.bf16.msra.mxu0 0
    %667 = vmatprep.subr.bf16.mxu0 0
    %668 = vmatpush1.bf16.msra.mxu0 0
    %669 = vmatprep.subr.bf16.mxu0 0
    %670 = vmatpush1.bf16.msra.mxu0 0
    %671 = vmatprep.subr.bf16.mxu0 0
    %672 = vmatpush1.bf16.msra.mxu0 0
    %673 = vmatprep.subr.bf16.mxu0 0
    %674 = vmatpush1.bf16.msra.mxu0 0
    %675 = vmatprep.subr.bf16.mxu0 0
    %676 = vmatpush1.bf16.msra.mxu0 0
    %677 = vmatprep.subr.bf16.mxu0 0
    %678 = vmatpush1.bf16.msra.mxu0 0
    %679 = vmatprep.subr.bf16.mxu0 0
    %680 = vmatpush1.bf16.msra.mxu0 0
    %681 = vmatprep.subr.bf16.mxu0 0
    %682 = vmatpush1.bf16.msra.mxu0 0
    %683 = vmatprep.subr.bf16.mxu0 0
    %684 = vmatpush1.bf16.msra.mxu0 0
    %685 = vmatprep.mubr.bf16.mxu0 0
    %686 = vmatmul.mubr.bf16.gmra.mrb[0].mxu0 %v651
    %v687 = vpop.f32.mrb[0].mxu0
    %v688 = vadd.f32 0.0, %v687
    %v689 = vpop.f32.mrb[0].mxu0
    %v690 = vpop.f32.mrb[0].mxu0
    %v691 = vpop.f32.mrb[0].mxu0
    %692 = vdwg.mxu0
    %v694 = vrot.slane %v688, 2
    %v696 = vadd.f32 %v88, %v694
    %v697 = vxor.u32 %v696, 2147483648
    %v698 = vmul.f32 %v697, 1.442695
    %v699 = vpow.pop %v698
    %v700 = vadd.f32 %v699, 1.0
    %v701 = vrcp.pop %v700
    %v702 = vmul.f32 1.0, %v701
    %v703 = vtanh.pop %v696
    %v705 = vrot.slane %v638, 6
    %v707 = vmul.f32 %v702, %v705
    %709 = vrot.lane.b32.xlu0 %v703, 64
    %v710 = vpop.permute.xlu0 %709
    %v712 = vmul.f32 %v702, %v710
    %714 = vrot.lane.b32.xlu0 %v712, 32
    %v715 = vpop.permute.xlu0 %714
    %v717 = vadd.f32 %v707, %v715
    %v718 = vtanh.pop %v717
    %720 = vrot.lane.b32.xlu0 %v718, 64
    %v721 = vpop.permute.xlu0 %720
    %v723 = vmul.f32 %v702, %v721
    %s724 = scalar_lea.vmem %s2, 16
    %v725 = vld [vmem:[%s724] sm:$0xf]
    %v726 = vld [vmem:[%s724 + $0x4] sm:$0xf]
    %v727 = vld [vmem:[%s724 + $0x8] sm:$0xf]
    %v728 = vld [vmem:[%s724 + $0xc] sm:$0xf]
    %s729 = scalar_lea.vmem [#allocation2], 16
    %v730 = vld [vmem:[%s729] sm:$0xf]
    %v731 = vld [vmem:[%s729 + $0x4] sm:$0xf]
    %v732 = vld [vmem:[%s729 + $0x8] sm:$0xf]
    %v733 = vld [vmem:[%s729 + $0xc] sm:$0xf]
    %v734 = vld [vmem:[%s3 + $0x1] sm:$0x1]
    %v735 = vlaneseq
    %v736 = vshrl.u32 %v735, 7
    %v737 = vsub.s32 0, %v736
    %v738 = vrot.slane %v734, %v737
    %v743 = vunpack.c.l.b16 %v730
    %v744 = vunpack.c.l.b16 %v731
    %v745 = vunpack.c.l.b16 %v732
    %v746 = vunpack.c.l.b16 %v733
    %v747 = vpack.c.b16 %v744, %v743
    %v748 = vpack.c.b16 %v746, %v745
    %751 = vmatprep.subr.bf16.mxu0 0
    %752 = vmatpush1.bf16.msra.mxu0 %v747
    %753 = vmatprep.subr.bf16.mxu0 0
    %754 = vmatpush1.bf16.msra.mxu0 %v748
    %755 = vmatprep.subr.bf16.mxu0 0
    %756 = vmatpush1.bf16.msra.mxu0 0
    %757 = vmatprep.subr.bf16.mxu0 0
    %758 = vmatpush1.bf16.msra.mxu0 0
    %759 = vmatprep.subr.bf16.mxu0 0
    %760 = vmatpush1.bf16.msra.mxu0 0
    %761 = vmatprep.subr.bf16.mxu0 0
    %762 = vmatpush1.bf16.msra.mxu0 0
    %763 = vmatprep.subr.bf16.mxu0 0
    %764 = vmatpush1.bf16.msra.mxu0 0
    %765 = vmatprep.subr.bf16.mxu0 0
    %766 = vmatpush1.bf16.msra.mxu0 0
    %767 = vmatprep.subr.bf16.mxu0 0
    %768 = vmatpush1.bf16.msra.mxu0 0
    %769 = vmatprep.subr.bf16.mxu0 0
    %770 = vmatpush1.bf16.msra.mxu0 0
    %771 = vmatprep.subr.bf16.mxu0 0
    %772 = vmatpush1.bf16.msra.mxu0 0
    %773 = vmatprep.subr.bf16.mxu0 0
    %774 = vmatpush1.bf16.msra.mxu0 0
    %775 = vmatprep.subr.bf16.mxu0 0
    %776 = vmatpush1.bf16.msra.mxu0 0
    %777 = vmatprep.subr.bf16.mxu0 0
    %778 = vmatpush1.bf16.msra.mxu0 0
    %779 = vmatprep.subr.bf16.mxu0 0
    %780 = vmatpush1.bf16.msra.mxu0 0
    %781 = vmatprep.subr.bf16.mxu0 0
    %782 = vmatpush1.bf16.msra.mxu0 0
    %783 = vmatprep.mubr.bf16.mxu0 0
    %784 = vmatmul.mubr.bf16.gmra.mrb[0].mxu0 %v181
    %v785 = vpop.f32.mrb[0].mxu0
    %v786 = vadd.f32 %v738, %v785
    %v787 = vpop.f32.mrb[0].mxu0
    %v788 = vpop.f32.mrb[0].mxu0
    %v789 = vpop.f32.mrb[0].mxu0
    %790 = vdwg.mxu0
    %v795 = vunpack.c.l.b16 %v725
    %v796 = vunpack.c.l.b16 %v726
    %v797 = vunpack.c.l.b16 %v727
    %v798 = vunpack.c.l.b16 %v728
    %v799 = vpack.c.b16 %v796, %v795
    %v800 = vpack.c.b16 %v798, %v797
    %803 = vmatprep.subr.bf16.mxu0 0
    %804 = vmatpush1.bf16.msra.mxu0 %v799
    %805 = vmatprep.subr.bf16.mxu0 0
    %806 = vmatpush1.bf16.msra.mxu0 %v800
    %807 = vmatprep.subr.bf16.mxu0 0
    %808 = vmatpush1.bf16.msra.mxu0 0
    %809 = vmatprep.subr.bf16.mxu0 0
    %810 = vmatpush1.bf16.msra.mxu0 0
    %811 = vmatprep.subr.bf16.mxu0 0
    %812 = vmatpush1.bf16.msra.mxu0 0
    %813 = vmatprep.subr.bf16.mxu0 0
    %814 = vmatpush1.bf16.msra.mxu0 0
    %815 = vmatprep.subr.bf16.mxu0 0
    %816 = vmatpush1.bf16.msra.mxu0 0
    %817 = vmatprep.subr.bf16.mxu0 0
    %818 = vmatpush1.bf16.msra.mxu0 0
    %819 = vmatprep.subr.bf16.mxu0 0
    %820 = vmatpush1.bf16.msra.mxu0 0
    %821 = vmatprep.subr.bf16.mxu0 0
    %822 = vmatpush1.bf16.msra.mxu0 0
    %823 = vmatprep.subr.bf16.mxu0 0
    %824 = vmatpush1.bf16.msra.mxu0 0
    %825 = vmatprep.subr.bf16.mxu0 0
    %826 = vmatpush1.bf16.msra.mxu0 0
    %827 = vmatprep.subr.bf16.mxu0 0
    %828 = vmatpush1.bf16.msra.mxu0 0
    %829 = vmatprep.subr.bf16.mxu0 0
    %830 = vmatpush1.bf16.msra.mxu0 0
    %831 = vmatprep.subr.bf16.mxu0 0
    %832 = vmatpush1.bf16.msra.mxu0 0
    %833 = vmatprep.subr.bf16.mxu0 0
    %834 = vmatpush1.bf16.msra.mxu0 0
    %835 = vmatprep.mubr.bf16.mxu0 0
    %836 = vmatmul.mubr.bf16.gmra.mrb[0].mxu0 %v109
    %v837 = vpop.f32.mrb[0].mxu0
    %v838 = vadd.f32 0.0, %v837
    %v839 = vpop.f32.mrb[0].mxu0
    %v840 = vpop.f32.mrb[0].mxu0
    %v841 = vpop.f32.mrb[0].mxu0
    %842 = vdwg.mxu0
    %v843 = vadd.f32 %v786, %v838
    %v844 = vxor.u32 %v843, 2147483648
    %v845 = vmul.f32 %v844, 1.442695
    %v846 = vpow.pop %v845
    %v847 = vadd.f32 %v846, 1.0
    %v848 = vrcp.pop %v847
    %v849 = vmul.f32 1.0, %v848
    %v850 = vtanh.pop %v843
    %v851 = vmul.f32 %v849, 0.0
    %853 = vrot.lane.b32.xlu0 %v850, 64
    %v854 = vpop.permute.xlu0 %853
    %v856 = vmul.f32 %v849, %v854
    %858 = vrot.lane.b32.xlu0 %v856, 32
    %v859 = vpop.permute.xlu0 %858
    %v861 = vadd.f32 %v851, %v859
    %v862 = vtanh.pop %v861
    %864 = vrot.lane.b32.xlu0 %v862, 64
    %v865 = vpop.permute.xlu0 %864
    %v867 = vmul.f32 %v849, %v865
    %868 = vmatprep.subr.bf16.mxu0 0
    %869 = vmatpush1.bf16.msra.mxu0 %v747
    %870 = vmatprep.subr.bf16.mxu0 0
    %871 = vmatpush1.bf16.msra.mxu0 %v748
    %872 = vmatprep.subr.bf16.mxu0 0
    %873 = vmatpush1.bf16.msra.mxu0 0
    %874 = vmatprep.subr.bf16.mxu0 0
    %875 = vmatpush1.bf16.msra.mxu0 0
    %876 = vmatprep.subr.bf16.mxu0 0
    %877 = vmatpush1.bf16.msra.mxu0 0
    %878 = vmatprep.subr.bf16.mxu0 0
    %879 = vmatpush1.bf16.msra.mxu0 0
    %880 = vmatprep.subr.bf16.mxu0 0
    %881 = vmatpush1.bf16.msra.mxu0 0
    %882 = vmatprep.subr.bf16.mxu0 0
    %883 = vmatpush1.bf16.msra.mxu0 0
    %884 = vmatprep.subr.bf16.mxu0 0
    %885 = vmatpush1.bf16.msra.mxu0 0
    %886 = vmatprep.subr.bf16.mxu0 0
    %887 = vmatpush1.bf16.msra.mxu0 0
    %888 = vmatprep.subr.bf16.mxu0 0
    %889 = vmatpush1.bf16.msra.mxu0 0
    %890 = vmatprep.subr.bf16.mxu0 0
    %891 = vmatpush1.bf16.msra.mxu0 0
    %892 = vmatprep.subr.bf16.mxu0 0
    %893 = vmatpush1.bf16.msra.mxu0 0
    %894 = vmatprep.subr.bf16.mxu0 0
    %895 = vmatpush1.bf16.msra.mxu0 0
    %896 = vmatprep.subr.bf16.mxu0 0
    %897 = vmatpush1.bf16.msra.mxu0 0
    %898 = vmatprep.subr.bf16.mxu0 0
    %899 = vmatpush1.bf16.msra.mxu0 0
    %900 = vmatprep.mubr.bf16.mxu0 0
    %901 = vmatmul.mubr.bf16.gmra.mrb[0].mxu0 %v260
    %v902 = vpop.f32.mrb[0].mxu0
    %v903 = vadd.f32 %v738, %v902
    %v904 = vpop.f32.mrb[0].mxu0
    %v905 = vpop.f32.mrb[0].mxu0
    %v906 = vpop.f32.mrb[0].mxu0
    %907 = vdwg.mxu0
    %v908 = vpack.c.bf16 %v867, %v867
    %910 = vrot.lane.b32.xlu0 %v908, 32
    %v911 = vpop.permute.xlu0 %910
    %v913 = vsel %vm107, %v911, 0
    %915 = vmatprep.subr.bf16.mxu0 0
    %916 = vmatpush1.bf16.msra.mxu0 %v799
    %917 = vmatprep.subr.bf16.mxu0 0
    %918 = vmatpush1.bf16.msra.mxu0 %v800
    %919 = vmatprep.subr.bf16.mxu0 0
    %920 = vmatpush1.bf16.msra.mxu0 0
    %921 = vmatprep.subr.bf16.mxu0 0
    %922 = vmatpush1.bf16.msra.mxu0 0
    %923 = vmatprep.subr.bf16.mxu0 0
    %924 = vmatpush1.bf16.msra.mxu0 0
    %925 = vmatprep.subr.bf16.mxu0 0
    %926 = vmatpush1.bf16.msra.mxu0 0
    %927 = vmatprep.subr.bf16.mxu0 0
    %928 = vmatpush1.bf16.msra.mxu0 0
    %929 = vmatprep.subr.bf16.mxu0 0
    %930 = vmatpush1.bf16.msra.mxu0 0
    %931 = vmatprep.subr.bf16.mxu0 0
    %932 = vmatpush1.bf16.msra.mxu0 0
    %933 = vmatprep.subr.bf16.mxu0 0
    %934 = vmatpush1.bf16.msra.mxu0 0
    %935 = vmatprep.subr.bf16.mxu0 0
    %936 = vmatpush1.bf16.msra.mxu0 0
    %937 = vmatprep.subr.bf16.mxu0 0
    %938 = vmatpush1.bf16.msra.mxu0 0
    %939 = vmatprep.subr.bf16.mxu0 0
    %940 = vmatpush1.bf16.msra.mxu0 0
    %941 = vmatprep.subr.bf16.mxu0 0
    %942 = vmatpush1.bf16.msra.mxu0 0
    %943 = vmatprep.subr.bf16.mxu0 0
    %944 = vmatpush1.bf16.msra.mxu0 0
    %945 = vmatprep.subr.bf16.mxu0 0
    %946 = vmatpush1.bf16.msra.mxu0 0
    %947 = vmatprep.mubr.bf16.mxu0 0
    %948 = vmatmul.mubr.bf16.gmra.mrb[0].mxu0 %v913
    %v949 = vpop.f32.mrb[0].mxu0
    %v950 = vadd.f32 0.0, %v949
    %v951 = vpop.f32.mrb[0].mxu0
    %v952 = vpop.f32.mrb[0].mxu0
    %v953 = vpop.f32.mrb[0].mxu0
    %954 = vdwg.mxu0
    %v955 = vadd.f32 %v903, %v950
    %v956 = vxor.u32 %v955, 2147483648
    %v957 = vmul.f32 %v956, 1.442695
    %v958 = vpow.pop %v957
    %v959 = vadd.f32 %v958, 1.0
    %v960 = vrcp.pop %v959
    %v961 = vmul.f32 1.0, %v960
    %v962 = vtanh.pop %v955
    %v963 = vmul.f32 %v961, %v861
    %965 = vrot.lane.b32.xlu0 %v962, 64
    %v966 = vpop.permute.xlu0 %965
    %v968 = vmul.f32 %v961, %v966
    %970 = vrot.lane.b32.xlu0 %v968, 32
    %v971 = vpop.permute.xlu0 %970
    %v973 = vadd.f32 %v963, %v971
    %v974 = vtanh.pop %v973
    %976 = vrot.lane.b32.xlu0 %v974, 64
    %v977 = vpop.permute.xlu0 %976
    %v979 = vmul.f32 %v961, %v977
    %980 = vmatprep.subr.bf16.mxu0 0
    %981 = vmatpush1.bf16.msra.mxu0 %v747
    %982 = vmatprep.subr.bf16.mxu0 0
    %983 = vmatpush1.bf16.msra.mxu0 %v748
    %984 = vmatprep.subr.bf16.mxu0 0
    %985 = vmatpush1.bf16.msra.mxu0 0
    %986 = vmatprep.subr.bf16.mxu0 0
    %987 = vmatpush1.bf16.msra.mxu0 0
    %988 = vmatprep.subr.bf16.mxu0 0
    %989 = vmatpush1.bf16.msra.mxu0 0
    %990 = vmatprep.subr.bf16.mxu0 0
    %991 = vmatpush1.bf16.msra.mxu0 0
    %992 = vmatprep.subr.bf16.mxu0 0
    %993 = vmatpush1.bf16.msra.mxu0 0
    %994 = vmatprep.subr.bf16.mxu0 0
    %995 = vmatpush1.bf16.msra.mxu0 0
    %996 = vmatprep.subr.bf16.mxu0 0
    %997 = vmatpush1.bf16.msra.mxu0 0
    %998 = vmatprep.subr.bf16.mxu0 0
    %999 = vmatpush1.bf16.msra.mxu0 0
    %1000 = vmatprep.subr.bf16.mxu0 0
    %1001 = vmatpush1.bf16.msra.mxu0 0
    %1002 = vmatprep.subr.bf16.mxu0 0
    %1003 = vmatpush1.bf16.msra.mxu0 0
    %1004 = vmatprep.subr.bf16.mxu0 0
    %1005 = vmatpush1.bf16.msra.mxu0 0
    %1006 = vmatprep.subr.bf16.mxu0 0
    %1007 = vmatpush1.bf16.msra.mxu0 0
    %1008 = vmatprep.subr.bf16.mxu0 0
    %1009 = vmatpush1.bf16.msra.mxu0 0
    %1010 = vmatprep.subr.bf16.mxu0 0
    %1011 = vmatpush1.bf16.msra.mxu0 0
    %1012 = vmatprep.mubr.bf16.mxu0 0
    %1013 = vmatmul.mubr.bf16.gmra.mrb[0].mxu0 %v339
    %v1014 = vpop.f32.mrb[0].mxu0
    %v1015 = vadd.f32 %v738, %v1014
    %v1016 = vpop.f32.mrb[0].mxu0
    %v1017 = vpop.f32.mrb[0].mxu0
    %v1018 = vpop.f32.mrb[0].mxu0
    %1019 = vdwg.mxu0
    %v1020 = vpack.c.bf16 %v979, %v979
    %1022 = vrot.lane.b32.xlu0 %v1020, 32
    %v1023 = vpop.permute.xlu0 %1022
    %v1025 = vsel %vm107, %v1023, 0
    %1027 = vmatprep.subr.bf16.mxu0 0
    %1028 = vmatpush1.bf16.msra.mxu0 %v799
    %1029 = vmatprep.subr.bf16.mxu0 0
    %1030 = vmatpush1.bf16.msra.mxu0 %v800
    %1031 = vmatprep.subr.bf16.mxu0 0
    %1032 = vmatpush1.bf16.msra.mxu0 0
    %1033 = vmatprep.subr.bf16.mxu0 0
    %1034 = vmatpush1.bf16.msra.mxu0 0
    %1035 = vmatprep.subr.bf16.mxu0 0
    %1036 = vmatpush1.bf16.msra.mxu0 0
    %1037 = vmatprep.subr.bf16.mxu0 0
    %1038 = vmatpush1.bf16.msra.mxu0 0
    %1039 = vmatprep.subr.bf16.mxu0 0
    %1040 = vmatpush1.bf16.msra.mxu0 0
    %1041 = vmatprep.subr.bf16.mxu0 0
    %1042 = vmatpush1.bf16.msra.mxu0 0
    %1043 = vmatprep.subr.bf16.mxu0 0
    %1044 = vmatpush1.bf16.msra.mxu0 0
    %1045 = vmatprep.subr.bf16.mxu0 0
    %1046 = vmatpush1.bf16.msra.mxu0 0
    %1047 = vmatprep.subr.bf16.mxu0 0
    %1048 = vmatpush1.bf16.msra.mxu0 0
    %1049 = vmatprep.subr.bf16.mxu0 0
    %1050 = vmatpush1.bf16.msra.mxu0 0
    %1051 = vmatprep.subr.bf16.mxu0 0
    %1052 = vmatpush1.bf16.msra.mxu0 0
    %1053 = vmatprep.subr.bf16.mxu0 0
    %1054 = vmatpush1.bf16.msra.mxu0 0
    %1055 = vmatprep.subr.bf16.mxu0 0
    %1056 = vmatpush1.bf16.msra.mxu0 0
    %1057 = vmatprep.subr.bf16.mxu0 0
    %1058 = vmatpush1.bf16.msra.mxu0 0
    %1059 = vmatprep.mubr.bf16.mxu0 0
    %1060 = vmatmul.mubr.bf16.gmra.mrb[0].mxu0 %v1025
    %v1061 = vpop.f32.mrb[0].mxu0
    %v1062 = vadd.f32 0.0, %v1061
    %v1063 = vpop.f32.mrb[0].mxu0
    %v1064 = vpop.f32.mrb[0].mxu0
    %v1065 = vpop.f32.mrb[0].mxu0
    %1066 = vdwg.mxu0
    %v1067 = vadd.f32 %v1015, %v1062
    %v1068 = vxor.u32 %v1067, 2147483648
    %v1069 = vmul.f32 %v1068, 1.442695
    %v1070 = vpow.pop %v1069
    %v1071 = vadd.f32 %v1070, 1.0
    %v1072 = vrcp.pop %v1071
    %v1073 = vmul.f32 1.0, %v1072
    %v1074 = vtanh.pop %v1067
    %v1075 = vmul.f32 %v1073, %v973
    %1077 = vrot.lane.b32.xlu0 %v1074, 64
    %v1078 = vpop.permute.xlu0 %1077
    %v1080 = vmul.f32 %v1073, %v1078
    %1082 = vrot.lane.b32.xlu0 %v1080, 32
    %v1083 = vpop.permute.xlu0 %1082
    %v1085 = vadd.f32 %v1075, %v1083
    %v1086 = vtanh.pop %v1085
    %1088 = vrot.lane.b32.xlu0 %v1086, 64
    %v1089 = vpop.permute.xlu0 %1088
    %v1091 = vmul.f32 %v1073, %v1089
    %1092 = vmatprep.subr.bf16.mxu0 0
    %1093 = vmatpush1.bf16.msra.mxu0 %v747
    %1094 = vmatprep.subr.bf16.mxu0 0
    %1095 = vmatpush1.bf16.msra.mxu0 %v748
    %1096 = vmatprep.subr.bf16.mxu0 0
    %1097 = vmatpush1.bf16.msra.mxu0 0
    %1098 = vmatprep.subr.bf16.mxu0 0
    %1099 = vmatpush1.bf16.msra.mxu0 0
    %1100 = vmatprep.subr.bf16.mxu0 0
    %1101 = vmatpush1.bf16.msra.mxu0 0
    %1102 = vmatprep.subr.bf16.mxu0 0
    %1103 = vmatpush1.bf16.msra.mxu0 0
    %1104 = vmatprep.subr.bf16.mxu0 0
    %1105 = vmatpush1.bf16.msra.mxu0 0
    %1106 = vmatprep.subr.bf16.mxu0 0
    %1107 = vmatpush1.bf16.msra.mxu0 0
    %1108 = vmatprep.subr.bf16.mxu0 0
    %1109 = vmatpush1.bf16.msra.mxu0 0
    %1110 = vmatprep.subr.bf16.mxu0 0
    %1111 = vmatpush1.bf16.msra.mxu0 0
    %1112 = vmatprep.subr.bf16.mxu0 0
    %1113 = vmatpush1.bf16.msra.mxu0 0
    %1114 = vmatprep.subr.bf16.mxu0 0
    %1115 = vmatpush1.bf16.msra.mxu0 0
    %1116 = vmatprep.subr.bf16.mxu0 0
    %1117 = vmatpush1.bf16.msra.mxu0 0
    %1118 = vmatprep.subr.bf16.mxu0 0
    %1119 = vmatpush1.bf16.msra.mxu0 0
    %1120 = vmatprep.subr.bf16.mxu0 0
    %1121 = vmatpush1.bf16.msra.mxu0 0
    %1122 = vmatprep.subr.bf16.mxu0 0
    %1123 = vmatpush1.bf16.msra.mxu0 0
    %1124 = vmatprep.mubr.bf16.mxu0 0
    %1125 = vmatmul.mubr.bf16.gmra.mrb[0].mxu0 %v418
    %v1126 = vpop.f32.mrb[0].mxu0
    %v1127 = vadd.f32 %v738, %v1126
    %v1128 = vpop.f32.mrb[0].mxu0
    %v1129 = vpop.f32.mrb[0].mxu0
    %v1130 = vpop.f32.mrb[0].mxu0
    %1131 = vdwg.mxu0
    %v1132 = vpack.c.bf16 %v1091, %v1091
    %1134 = vrot.lane.b32.xlu0 %v1132, 32
    %v1135 = vpop.permute.xlu0 %1134
    %v1137 = vsel %vm107, %v1135, 0
    %1139 = vmatprep.subr.bf16.mxu0 0
    %1140 = vmatpush1.bf16.msra.mxu0 %v799
    %1141 = vmatprep.subr.bf16.mxu0 0
    %1142 = vmatpush1.bf16.msra.mxu0 %v800
    %1143 = vmatprep.subr.bf16.mxu0 0
    %1144 = vmatpush1.bf16.msra.mxu0 0
    %1145 = vmatprep.subr.bf16.mxu0 0
    %1146 = vmatpush1.bf16.msra.mxu0 0
    %1147 = vmatprep.subr.bf16.mxu0 0
    %1148 = vmatpush1.bf16.msra.mxu0 0
    %1149 = vmatprep.subr.bf16.mxu0 0
    %1150 = vmatpush1.bf16.msra.mxu0 0
    %1151 = vmatprep.subr.bf16.mxu0 0
    %1152 = vmatpush1.bf16.msra.mxu0 0
    %1153 = vmatprep.subr.bf16.mxu0 0
    %1154 = vmatpush1.bf16.msra.mxu0 0
    %1155 = vmatprep.subr.bf16.mxu0 0
    %1156 = vmatpush1.bf16.msra.mxu0 0
    %1157 = vmatprep.subr.bf16.mxu0 0
    %1158 = vmatpush1.bf16.msra.mxu0 0
    %1159 = vmatprep.subr.bf16.mxu0 0
    %1160 = vmatpush1.bf16.msra.mxu0 0
    %1161 = vmatprep.subr.bf16.mxu0 0
    %1162 = vmatpush1.bf16.msra.mxu0 0
    %1163 = vmatprep.subr.bf16.mxu0 0
    %1164 = vmatpush1.bf16.msra.mxu0 0
    %1165 = vmatprep.subr.bf16.mxu0 0
    %1166 = vmatpush1.bf16.msra.mxu0 0
    %1167 = vmatprep.subr.bf16.mxu0 0
    %1168 = vmatpush1.bf16.msra.mxu0 0
    %1169 = vmatprep.subr.bf16.mxu0 0
    %1170 = vmatpush1.bf16.msra.mxu0 0
    %1171 = vmatprep.mubr.bf16.mxu0 0
    %1172 = vmatmul.mubr.bf16.gmra.mrb[0].mxu0 %v1137
    %v1173 = vpop.f32.mrb[0].mxu0
    %v1174 = vadd.f32 0.0, %v1173
    %v1175 = vpop.f32.mrb[0].mxu0
    %v1176 = vpop.f32.mrb[0].mxu0
    %v1177 = vpop.f32.mrb[0].mxu0
    %1178 = vdwg.mxu0
    %v1179 = vadd.f32 %v1127, %v1174
    %v1180 = vxor.u32 %v1179, 2147483648
    %v1181 = vmul.f32 %v1180, 1.442695
    %v1182 = vpow.pop %v1181
    %v1183 = vadd.f32 %v1182, 1.0
    %v1184 = vrcp.pop %v1183
    %v1185 = vmul.f32 1.0, %v1184
    %v1186 = vtanh.pop %v1179
    %v1187 = vmul.f32 %v1185, %v1085
    %1189 = vrot.lane.b32.xlu0 %v1186, 64
    %v1190 = vpop.permute.xlu0 %1189
    %v1192 = vmul.f32 %v1185, %v1190
    %1194 = vrot.lane.b32.xlu0 %v1192, 32
    %v1195 = vpop.permute.xlu0 %1194
    %v1197 = vadd.f32 %v1187, %v1195
    %v1198 = vtanh.pop %v1197
    %1200 = vrot.lane.b32.xlu0 %v1198, 64
    %v1201 = vpop.permute.xlu0 %1200
    %v1203 = vmul.f32 %v1185, %v1201
    %1204 = vmatprep.subr.bf16.mxu0 0
    %1205 = vmatpush1.bf16.msra.mxu0 %v747
    %1206 = vmatprep.subr.bf16.mxu0 0
    %1207 = vmatpush1.bf16.msra.mxu0 %v748
    %1208 = vmatprep.subr.bf16.mxu0 0
    %1209 = vmatpush1.bf16.msra.mxu0 0
    %1210 = vmatprep.subr.bf16.mxu0 0
    %1211 = vmatpush1.bf16.msra.mxu0 0
    %1212 = vmatprep.subr.bf16.mxu0 0
    %1213 = vmatpush1.bf16.msra.mxu0 0
    %1214 = vmatprep.subr.bf16.mxu0 0
    %1215 = vmatpush1.bf16.msra.mxu0 0
    %1216 = vmatprep.subr.bf16.mxu0 0
    %1217 = vmatpush1.bf16.msra.mxu0 0
    %1218 = vmatprep.subr.bf16.mxu0 0
    %1219 = vmatpush1.bf16.msra.mxu0 0
    %1220 = vmatprep.subr.bf16.mxu0 0
    %1221 = vmatpush1.bf16.msra.mxu0 0
    %1222 = vmatprep.subr.bf16.mxu0 0
    %1223 = vmatpush1.bf16.msra.mxu0 0
    %1224 = vmatprep.subr.bf16.mxu0 0
    %1225 = vmatpush1.bf16.msra.mxu0 0
    %1226 = vmatprep.subr.bf16.mxu0 0
    %1227 = vmatpush1.bf16.msra.mxu0 0
    %1228 = vmatprep.subr.bf16.mxu0 0
    %1229 = vmatpush1.bf16.msra.mxu0 0
    %1230 = vmatprep.subr.bf16.mxu0 0
    %1231 = vmatpush1.bf16.msra.mxu0 0
    %1232 = vmatprep.subr.bf16.mxu0 0
    %1233 = vmatpush1.bf16.msra.mxu0 0
    %1234 = vmatprep.subr.bf16.mxu0 0
    %1235 = vmatpush1.bf16.msra.mxu0 0
    %1236 = vmatprep.mubr.bf16.mxu0 0
    %1237 = vmatmul.mubr.bf16.gmra.mrb[0].mxu0 %v493
    %v1238 = vpop.f32.mrb[0].mxu0
    %v1239 = vadd.f32 %v738, %v1238
    %v1240 = vpop.f32.mrb[0].mxu0
    %v1241 = vpop.f32.mrb[0].mxu0
    %v1242 = vpop.f32.mrb[0].mxu0
    %1243 = vdwg.mxu0
    %v1244 = vpack.c.bf16 %v1203, %v1203
    %1246 = vrot.lane.b32.xlu0 %v1244, 32
    %v1247 = vpop.permute.xlu0 %1246
    %v1249 = vsel %vm107, %v1247, 0
    %1251 = vmatprep.subr.bf16.mxu0 0
    %1252 = vmatpush1.bf16.msra.mxu0 %v799
    %1253 = vmatprep.subr.bf16.mxu0 0
    %1254 = vmatpush1.bf16.msra.mxu0 %v800
    %1255 = vmatprep.subr.bf16.mxu0 0
    %1256 = vmatpush1.bf16.msra.mxu0 0
    %1257 = vmatprep.subr.bf16.mxu0 0
    %1258 = vmatpush1.bf16.msra.mxu0 0
    %1259 = vmatprep.subr.bf16.mxu0 0
    %1260 = vmatpush1.bf16.msra.mxu0 0
    %1261 = vmatprep.subr.bf16.mxu0 0
    %1262 = vmatpush1.bf16.msra.mxu0 0
    %1263 = vmatprep.subr.bf16.mxu0 0
    %1264 = vmatpush1.bf16.msra.mxu0 0
    %1265 = vmatprep.subr.bf16.mxu0 0
    %1266 = vmatpush1.bf16.msra.mxu0 0
    %1267 = vmatprep.subr.bf16.mxu0 0
    %1268 = vmatpush1.bf16.msra.mxu0 0
    %1269 = vmatprep.subr.bf16.mxu0 0
    %1270 = vmatpush1.bf16.msra.mxu0 0
    %1271 = vmatprep.subr.bf16.mxu0 0
    %1272 = vmatpush1.bf16.msra.mxu0 0
    %1273 = vmatprep.subr.bf16.mxu0 0
    %1274 = vmatpush1.bf16.msra.mxu0 0
    %1275 = vmatprep.subr.bf16.mxu0 0
    %1276 = vmatpush1.bf16.msra.mxu0 0
    %1277 = vmatprep.subr.bf16.mxu0 0
    %1278 = vmatpush1.bf16.msra.mxu0 0
    %1279 = vmatprep.subr.bf16.mxu0 0
    %1280 = vmatpush1.bf16.msra.mxu0 0
    %1281 = vmatprep.subr.bf16.mxu0 0
    %1282 = vmatpush1.bf16.msra.mxu0 0
    %1283 = vmatprep.mubr.bf16.mxu0 0
    %1284 = vmatmul.mubr.bf16.gmra.mrb[0].mxu0 %v1249
    %v1285 = vpop.f32.mrb[0].mxu0
    %v1286 = vadd.f32 0.0, %v1285
    %v1287 = vpop.f32.mrb[0].mxu0
    %v1288 = vpop.f32.mrb[0].mxu0
    %v1289 = vpop.f32.mrb[0].mxu0
    %1290 = vdwg.mxu0
    %v1291 = vadd.f32 %v1239, %v1286
    %v1292 = vxor.u32 %v1291, 2147483648
    %v1293 = vmul.f32 %v1292, 1.442695
    %v1294 = vpow.pop %v1293
    %v1295 = vadd.f32 %v1294, 1.0
    %v1296 = vrcp.pop %v1295
    %v1297 = vmul.f32 1.0, %v1296
    %v1298 = vtanh.pop %v1291
    %v1299 = vmul.f32 %v1297, %v1197
    %1301 = vrot.lane.b32.xlu0 %v1298, 64
    %v1302 = vpop.permute.xlu0 %1301
    %v1304 = vmul.f32 %v1297, %v1302
    %1306 = vrot.lane.b32.xlu0 %v1304, 32
    %v1307 = vpop.permute.xlu0 %1306
    %v1309 = vadd.f32 %v1299, %v1307
    %v1310 = vtanh.pop %v1309
    %1312 = vrot.lane.b32.xlu0 %v1310, 64
    %v1313 = vpop.permute.xlu0 %1312
    %v1315 = vmul.f32 %v1297, %v1313
    %1316 = vmatprep.subr.bf16.mxu0 0
    %1317 = vmatpush1.bf16.msra.mxu0 %v747
    %1318 = vmatprep.subr.bf16.mxu0 0
    %1319 = vmatpush1.bf16.msra.mxu0 %v748
    %1320 = vmatprep.subr.bf16.mxu0 0
    %1321 = vmatpush1.bf16.msra.mxu0 0
    %1322 = vmatprep.subr.bf16.mxu0 0
    %1323 = vmatpush1.bf16.msra.mxu0 0
    %1324 = vmatprep.subr.bf16.mxu0 0
    %1325 = vmatpush1.bf16.msra.mxu0 0
    %1326 = vmatprep.subr.bf16.mxu0 0
    %1327 = vmatpush1.bf16.msra.mxu0 0
    %1328 = vmatprep.subr.bf16.mxu0 0
    %1329 = vmatpush1.bf16.msra.mxu0 0
    %1330 = vmatprep.subr.bf16.mxu0 0
    %1331 = vmatpush1.bf16.msra.mxu0 0
    %1332 = vmatprep.subr.bf16.mxu0 0
    %1333 = vmatpush1.bf16.msra.mxu0 0
    %1334 = vmatprep.subr.bf16.mxu0 0
    %1335 = vmatpush1.bf16.msra.mxu0 0
    %1336 = vmatprep.subr.bf16.mxu0 0
    %1337 = vmatpush1.bf16.msra.mxu0 0
    %1338 = vmatprep.subr.bf16.mxu0 0
    %1339 = vmatpush1.bf16.msra.mxu0 0
    %1340 = vmatprep.subr.bf16.mxu0 0
    %1341 = vmatpush1.bf16.msra.mxu0 0
    %1342 = vmatprep.subr.bf16.mxu0 0
    %1343 = vmatpush1.bf16.msra.mxu0 0
    %1344 = vmatprep.subr.bf16.mxu0 0
    %1345 = vmatpush1.bf16.msra.mxu0 0
    %1346 = vmatprep.subr.bf16.mxu0 0
    %1347 = vmatpush1.bf16.msra.mxu0 0
    %1348 = vmatprep.mubr.bf16.mxu0 0
    %1349 = vmatmul.mubr.bf16.gmra.mrb[0].mxu0 %v572
    %v1350 = vpop.f32.mrb[0].mxu0
    %v1351 = vadd.f32 %v738, %v1350
    %v1352 = vpop.f32.mrb[0].mxu0
    %v1353 = vpop.f32.mrb[0].mxu0
    %v1354 = vpop.f32.mrb[0].mxu0
    %1355 = vdwg.mxu0
    %v1356 = vpack.c.bf16 %v1315, %v1315
    %1358 = vrot.lane.b32.xlu0 %v1356, 32
    %v1359 = vpop.permute.xlu0 %1358
    %v1361 = vsel %vm107, %v1359, 0
    %1363 = vmatprep.subr.bf16.mxu0 0
    %1364 = vmatpush1.bf16.msra.mxu0 %v799
    %1365 = vmatprep.subr.bf16.mxu0 0
    %1366 = vmatpush1.bf16.msra.mxu0 %v800
    %1367 = vmatprep.subr.bf16.mxu0 0
    %1368 = vmatpush1.bf16.msra.mxu0 0
    %1369 = vmatprep.subr.bf16.mxu0 0
    %1370 = vmatpush1.bf16.msra.mxu0 0
    %1371 = vmatprep.subr.bf16.mxu0 0
    %1372 = vmatpush1.bf16.msra.mxu0 0
    %1373 = vmatprep.subr.bf16.mxu0 0
    %1374 = vmatpush1.bf16.msra.mxu0 0
    %1375 = vmatprep.subr.bf16.mxu0 0
    %1376 = vmatpush1.bf16.msra.mxu0 0
    %1377 = vmatprep.subr.bf16.mxu0 0
    %1378 = vmatpush1.bf16.msra.mxu0 0
    %1379 = vmatprep.subr.bf16.mxu0 0
    %1380 = vmatpush1.bf16.msra.mxu0 0
    %1381 = vmatprep.subr.bf16.mxu0 0
    %1382 = vmatpush1.bf16.msra.mxu0 0
    %1383 = vmatprep.subr.bf16.mxu0 0
    %1384 = vmatpush1.bf16.msra.mxu0 0
    %1385 = vmatprep.subr.bf16.mxu0 0
    %1386 = vmatpush1.bf16.msra.mxu0 0
    %1387 = vmatprep.subr.bf16.mxu0 0
    %1388 = vmatpush1.bf16.msra.mxu0 0
    %1389 = vmatprep.subr.bf16.mxu0 0
    %1390 = vmatpush1.bf16.msra.mxu0 0
    %1391 = vmatprep.subr.bf16.mxu0 0
    %1392 = vmatpush1.bf16.msra.mxu0 0
    %1393 = vmatprep.subr.bf16.mxu0 0
    %1394 = vmatpush1.bf16.msra.mxu0 0
    %1395 = vmatprep.mubr.bf16.mxu0 0
    %1396 = vmatmul.mubr.bf16.gmra.mrb[0].mxu0 %v1361
    %v1397 = vpop.f32.mrb[0].mxu0
    %v1398 = vadd.f32 0.0, %v1397
    %v1399 = vpop.f32.mrb[0].mxu0
    %v1400 = vpop.f32.mrb[0].mxu0
    %v1401 = vpop.f32.mrb[0].mxu0
    %1402 = vdwg.mxu0
    %v1403 = vadd.f32 %v1351, %v1398
    %v1404 = vxor.u32 %v1403, 2147483648
    %v1405 = vmul.f32 %v1404, 1.442695
    %v1406 = vpow.pop %v1405
    %v1407 = vadd.f32 %v1406, 1.0
    %v1408 = vrcp.pop %v1407
    %v1409 = vmul.f32 1.0, %v1408
    %v1410 = vtanh.pop %v1403
    %v1411 = vmul.f32 %v1409, %v1309
    %1413 = vrot.lane.b32.xlu0 %v1410, 64
    %v1414 = vpop.permute.xlu0 %1413
    %v1416 = vmul.f32 %v1409, %v1414
    %1418 = vrot.lane.b32.xlu0 %v1416, 32
    %v1419 = vpop.permute.xlu0 %1418
    %v1421 = vadd.f32 %v1411, %v1419
    %v1422 = vtanh.pop %v1421
    %1424 = vrot.lane.b32.xlu0 %v1422, 64
    %v1425 = vpop.permute.xlu0 %1424
    %v1427 = vmul.f32 %v1409, %v1425
    %1428 = vmatprep.subr.bf16.mxu0 0
    %1429 = vmatpush1.bf16.msra.mxu0 %v747
    %1430 = vmatprep.subr.bf16.mxu0 0
    %1431 = vmatpush1.bf16.msra.mxu0 %v748
    %1432 = vmatprep.subr.bf16.mxu0 0
    %1433 = vmatpush1.bf16.msra.mxu0 0
    %1434 = vmatprep.subr.bf16.mxu0 0
    %1435 = vmatpush1.bf16.msra.mxu0 0
    %1436 = vmatprep.subr.bf16.mxu0 0
    %1437 = vmatpush1.bf16.msra.mxu0 0
    %1438 = vmatprep.subr.bf16.mxu0 0
    %1439 = vmatpush1.bf16.msra.mxu0 0
    %1440 = vmatprep.subr.bf16.mxu0 0
    %1441 = vmatpush1.bf16.msra.mxu0 0
    %1442 = vmatprep.subr.bf16.mxu0 0
    %1443 = vmatpush1.bf16.msra.mxu0 0
    %1444 = vmatprep.subr.bf16.mxu0 0
    %1445 = vmatpush1.bf16.msra.mxu0 0
    %1446 = vmatprep.subr.bf16.mxu0 0
    %1447 = vmatpush1.bf16.msra.mxu0 0
    %1448 = vmatprep.subr.bf16.mxu0 0
    %1449 = vmatpush1.bf16.msra.mxu0 0
    %1450 = vmatprep.subr.bf16.mxu0 0
    %1451 = vmatpush1.bf16.msra.mxu0 0
    %1452 = vmatprep.subr.bf16.mxu0 0
    %1453 = vmatpush1.bf16.msra.mxu0 0
    %1454 = vmatprep.subr.bf16.mxu0 0
    %1455 = vmatpush1.bf16.msra.mxu0 0
    %1456 = vmatprep.subr.bf16.mxu0 0
    %1457 = vmatpush1.bf16.msra.mxu0 0
    %1458 = vmatprep.subr.bf16.mxu0 0
    %1459 = vmatpush1.bf16.msra.mxu0 0
    %1460 = vmatprep.mubr.bf16.mxu0 0
    %1461 = vmatmul.mubr.bf16.gmra.mrb[0].mxu0 %v651
    %v1462 = vpop.f32.mrb[0].mxu0
    %v1463 = vadd.f32 %v738, %v1462
    %v1464 = vpop.f32.mrb[0].mxu0
    %v1465 = vpop.f32.mrb[0].mxu0
    %v1466 = vpop.f32.mrb[0].mxu0
    %1467 = vdwg.mxu0
    %v1468 = vpack.c.bf16 %v1427, %v1427
    %1470 = vrot.lane.b32.xlu0 %v1468, 32
    %v1471 = vpop.permute.xlu0 %1470
    %v1473 = vsel %vm107, %v1471, 0
    %1475 = vmatprep.subr.bf16.mxu0 0
    %1476 = vmatpush1.bf16.msra.mxu0 %v799
    %1477 = vmatprep.subr.bf16.mxu0 0
    %1478 = vmatpush1.bf16.msra.mxu0 %v800
    %1479 = vmatprep.subr.bf16.mxu0 0
    %1480 = vmatpush1.bf16.msra.mxu0 0
    %1481 = vmatprep.subr.bf16.mxu0 0
    %1482 = vmatpush1.bf16.msra.mxu0 0
    %1483 = vmatprep.subr.bf16.mxu0 0
    %1484 = vmatpush1.bf16.msra.mxu0 0
    %1485 = vmatprep.subr.bf16.mxu0 0
    %1486 = vmatpush1.bf16.msra.mxu0 0
    %1487 = vmatprep.subr.bf16.mxu0 0
    %1488 = vmatpush1.bf16.msra.mxu0 0
    %1489 = vmatprep.subr.bf16.mxu0 0
    %1490 = vmatpush1.bf16.msra.mxu0 0
    %1491 = vmatprep.subr.bf16.mxu0 0
    %1492 = vmatpush1.bf16.msra.mxu0 0
    %1493 = vmatprep.subr.bf16.mxu0 0
    %1494 = vmatpush1.bf16.msra.mxu0 0
    %1495 = vmatprep.subr.bf16.mxu0 0
    %1496 = vmatpush1.bf16.msra.mxu0 0
    %1497 = vmatprep.subr.bf16.mxu0 0
    %1498 = vmatpush1.bf16.msra.mxu0 0
    %1499 = vmatprep.subr.bf16.mxu0 0
    %1500 = vmatpush1.bf16.msra.mxu0 0
    %1501 = vmatprep.subr.bf16.mxu0 0
    %1502 = vmatpush1.bf16.msra.mxu0 0
    %1503 = vmatprep.subr.bf16.mxu0 0
    %1504 = vmatpush1.bf16.msra.mxu0 0
    %1505 = vmatprep.subr.bf16.mxu0 0
    %1506 = vmatpush1.bf16.msra.mxu0 0
    %1507 = vmatprep.mubr.bf16.mxu0 0
    %1508 = vmatmul.mubr.bf16.gmra.mrb[0].mxu0 %v1473
    %v1509 = vpop.f32.mrb[0].mxu0
    %v1510 = vadd.f32 0.0, %v1509
    %v1511 = vpop.f32.mrb[0].mxu0
    %v1512 = vpop.f32.mrb[0].mxu0
    %v1513 = vpop.f32.mrb[0].mxu0
    %1514 = vdwg.mxu0
    %v1515 = vadd.f32 %v1463, %v1510
    %v1516 = vxor.u32 %v1515, 2147483648
    %v1517 = vmul.f32 %v1516, 1.442695
    %v1518 = vpow.pop %v1517
    %v1519 = vadd.f32 %v1518, 1.0
    %v1520 = vrcp.pop %v1519
    %v1521 = vmul.f32 1.0, %v1520
    %v1522 = vtanh.pop %v1515
    %v1523 = vmul.f32 %v1521, %v1421
    %1525 = vrot.lane.b32.xlu0 %v1522, 64
    %v1526 = vpop.permute.xlu0 %1525
    %v1528 = vmul.f32 %v1521, %v1526
    %1530 = vrot.lane.b32.xlu0 %v1528, 32
    %v1531 = vpop.permute.xlu0 %1530
    %v1533 = vadd.f32 %v1523, %v1531
    %v1534 = vtanh.pop %v1533
    %1536 = vrot.lane.b32.xlu0 %v1534, 64
    %v1537 = vpop.permute.xlu0 %1536
    %v1539 = vmul.f32 %v1521, %v1537
    %v1540 = vpack.c.bf16 %v723, %v723
    %v1542 = vrot.slane %v1540, 3
    %1543 = vrot.lane.b32.xlu0 %v1542, 32
    %v1544 = vpop.permute.xlu0 %1543
    %v1546 = vsel %vm107, %v1544, 0
    %1548 = vmatprep.subr.bf16.mxu0 0
    %1549 = vmatpush1.bf16.msra.mxu0 %v747
    %1550 = vmatprep.subr.bf16.mxu0 0
    %1551 = vmatpush1.bf16.msra.mxu0 %v748
    %1552 = vmatprep.subr.bf16.mxu0 0
    %1553 = vmatpush1.bf16.msra.mxu0 0
    %1554 = vmatprep.subr.bf16.mxu0 0
    %1555 = vmatpush1.bf16.msra.mxu0 0
    %1556 = vmatprep.subr.bf16.mxu0 0
    %1557 = vmatpush1.bf16.msra.mxu0 0
    %1558 = vmatprep.subr.bf16.mxu0 0
    %1559 = vmatpush1.bf16.msra.mxu0 0
    %1560 = vmatprep.subr.bf16.mxu0 0
    %1561 = vmatpush1.bf16.msra.mxu0 0
    %1562 = vmatprep.subr.bf16.mxu0 0
    %1563 = vmatpush1.bf16.msra.mxu0 0
    %1564 = vmatprep.subr.bf16.mxu0 0
    %1565 = vmatpush1.bf16.msra.mxu0 0
    %1566 = vmatprep.subr.bf16.mxu0 0
    %1567 = vmatpush1.bf16.msra.mxu0 0
    %1568 = vmatprep.subr.bf16.mxu0 0
    %1569 = vmatpush1.bf16.msra.mxu0 0
    %1570 = vmatprep.subr.bf16.mxu0 0
    %1571 = vmatpush1.bf16.msra.mxu0 0
    %1572 = vmatprep.subr.bf16.mxu0 0
    %1573 = vmatpush1.bf16.msra.mxu0 0
    %1574 = vmatprep.subr.bf16.mxu0 0
    %1575 = vmatpush1.bf16.msra.mxu0 0
    %1576 = vmatprep.subr.bf16.mxu0 0
    %1577 = vmatpush1.bf16.msra.mxu0 0
    %1578 = vmatprep.subr.bf16.mxu0 0
    %1579 = vmatpush1.bf16.msra.mxu0 0
    %1580 = vmatprep.mubr.bf16.mxu0 0
    %1581 = vmatmul.mubr.bf16.gmra.mrb[0].mxu0 %v1546
    %v1582 = vpop.f32.mrb[0].mxu0
    %v1583 = vadd.f32 %v738, %v1582
    %v1584 = vpop.f32.mrb[0].mxu0
    %v1585 = vpop.f32.mrb[0].mxu0
    %v1586 = vpop.f32.mrb[0].mxu0
    %1587 = vdwg.mxu0
    %v1588 = vpack.c.bf16 %v1539, %v1539
    %1590 = vrot.lane.b32.xlu0 %v1588, 32
    %v1591 = vpop.permute.xlu0 %1590
    %v1593 = vsel %vm107, %v1591, 0
    %1595 = vmatprep.subr.bf16.mxu0 0
    %1596 = vmatpush1.bf16.msra.mxu0 %v799
    %1597 = vmatprep.subr.bf16.mxu0 0
    %1598 = vmatpush1.bf16.msra.mxu0 %v800
    %1599 = vmatprep.subr.bf16.mxu0 0
    %1600 = vmatpush1.bf16.msra.mxu0 0
    %1601 = vmatprep.subr.bf16.mxu0 0
    %1602 = vmatpush1.bf16.msra.mxu0 0
    %1603 = vmatprep.subr.bf16.mxu0 0
    %1604 = vmatpush1.bf16.msra.mxu0 0
    %1605 = vmatprep.subr.bf16.mxu0 0
    %1606 = vmatpush1.bf16.msra.mxu0 0
    %1607 = vmatprep.subr.bf16.mxu0 0
    %1608 = vmatpush1.bf16.msra.mxu0 0
    %1609 = vmatprep.subr.bf16.mxu0 0
    %1610 = vmatpush1.bf16.msra.mxu0 0
    %1611 = vmatprep.subr.bf16.mxu0 0
    %1612 = vmatpush1.bf16.msra.mxu0 0
    %1613 = vmatprep.subr.bf16.mxu0 0
    %1614 = vmatpush1.bf16.msra.mxu0 0
    %1615 = vmatprep.subr.bf16.mxu0 0
    %1616 = vmatpush1.bf16.msra.mxu0 0
    %1617 = vmatprep.subr.bf16.mxu0 0
    %1618 = vmatpush1.bf16.msra.mxu0 0
    %1619 = vmatprep.subr.bf16.mxu0 0
    %1620 = vmatpush1.bf16.msra.mxu0 0
    %1621 = vmatprep.subr.bf16.mxu0 0
    %1622 = vmatpush1.bf16.msra.mxu0 0
    %1623 = vmatprep.subr.bf16.mxu0 0
    %1624 = vmatpush1.bf16.msra.mxu0 0
    %1625 = vmatprep.subr.bf16.mxu0 0
    %1626 = vmatpush1.bf16.msra.mxu0 0
    %1627 = vmatprep.mubr.bf16.mxu0 0
    %1628 = vmatmul.mubr.bf16.gmra.mrb[0].mxu0 %v1593
    %v1629 = vpop.f32.mrb[0].mxu0
    %v1630 = vadd.f32 0.0, %v1629
    %v1631 = vpop.f32.mrb[0].mxu0
    %v1632 = vpop.f32.mrb[0].mxu0
    %v1633 = vpop.f32.mrb[0].mxu0
    %1634 = vdwg.mxu0
    %v1635 = vadd.f32 %v1583, %v1630
    %v1636 = vxor.u32 %v1635, 2147483648
    %v1637 = vmul.f32 %v1636, 1.442695
    %v1638 = vpow.pop %v1637
    %v1639 = vadd.f32 %v1638, 1.0
    %v1640 = vrcp.pop %v1639
    %v1641 = vmul.f32 1.0, %v1640
    %v1642 = vtanh.pop %v1635
    %v1643 = vmul.f32 %v1641, %v1533
    %1645 = vrot.lane.b32.xlu0 %v1642, 64
    %v1646 = vpop.permute.xlu0 %1645
    %v1648 = vmul.f32 %v1641, %v1646
    %1650 = vrot.lane.b32.xlu0 %v1648, 32
    %v1651 = vpop.permute.xlu0 %1650
    %v1653 = vadd.f32 %v1643, %v1651
    %v1654 = vtanh.pop %v1653
    %1656 = vrot.lane.b32.xlu0 %v1654, 64
    %v1657 = vpop.permute.xlu0 %1656
    %v1659 = vmul.f32 %v1641, %v1657
    %vm1660 = vcmask 1042176
    %v1661 = vsel %vm1660, %v867, 0.0
    %v1662 = vrot.slane %v1661, 4
    %v1663 = vadd.f32 %v1661, %v1662
    %v1664 = vrot.slane %v1663, 2
    %v1665 = vadd.f32 %v1663, %v1664
    %v1666 = vrot.slane %v1665, 1
    %v1667 = vadd.f32 %v1665, %v1666
    %v1668 = vadd.f32 %v1667, 0.0
    %v1669 = vsel %vm1660, %v979, 0.0
    %v1670 = vrot.slane %v1669, 4
    %v1671 = vadd.f32 %v1669, %v1670
    %v1672 = vrot.slane %v1671, 2
    %v1673 = vadd.f32 %v1671, %v1672
    %v1674 = vrot.slane %v1673, 1
    %v1675 = vadd.f32 %v1673, %v1674
    %v1676 = vadd.f32 %v1668, %v1675
    %v1677 = vsel %vm1660, %v1091, 0.0
    %v1678 = vrot.slane %v1677, 4
    %v1679 = vadd.f32 %v1677, %v1678
    %v1680 = vrot.slane %v1679, 2
    %v1681 = vadd.f32 %v1679, %v1680
    %v1682 = vrot.slane %v1681, 1
    %v1683 = vadd.f32 %v1681, %v1682
    %v1684 = vadd.f32 %v1676, %v1683
    %v1685 = vsel %vm1660, %v1203, 0.0
    %v1686 = vrot.slane %v1685, 4
    %v1687 = vadd.f32 %v1685, %v1686
    %v1688 = vrot.slane %v1687, 2
    %v1689 = vadd.f32 %v1687, %v1688
    %v1690 = vrot.slane %v1689, 1
    %v1691 = vadd.f32 %v1689, %v1690
    %v1692 = vadd.f32 %v1684, %v1691
    %v1693 = vsel %vm1660, %v1315, 0.0
    %v1694 = vrot.slane %v1693, 4
    %v1695 = vadd.f32 %v1693, %v1694
    %v1696 = vrot.slane %v1695, 2
    %v1697 = vadd.f32 %v1695, %v1696
    %v1698 = vrot.slane %v1697, 1
    %v1699 = vadd.f32 %v1697, %v1698
    %v1700 = vadd.f32 %v1692, %v1699
    %v1701 = vsel %vm1660, %v1427, 0.0
    %v1702 = vrot.slane %v1701, 4
    %v1703 = vadd.f32 %v1701, %v1702
    %v1704 = vrot.slane %v1703, 2
    %v1705 = vadd.f32 %v1703, %v1704
    %v1706 = vrot.slane %v1705, 1
    %v1707 = vadd.f32 %v1705, %v1706
    %v1708 = vadd.f32 %v1700, %v1707
    %v1709 = vsel %vm1660, %v1539, 0.0
    %v1710 = vrot.slane %v1709, 4
    %v1711 = vadd.f32 %v1709, %v1710
    %v1712 = vrot.slane %v1711, 2
    %v1713 = vadd.f32 %v1711, %v1712
    %v1714 = vrot.slane %v1713, 1
    %v1715 = vadd.f32 %v1713, %v1714
    %v1716 = vadd.f32 %v1708, %v1715
    %v1717 = vsel %vm1660, %v1659, 0.0
    %v1718 = vrot.slane %v1717, 4
    %v1719 = vadd.f32 %v1717, %v1718
    %v1720 = vrot.slane %v1719, 2
    %v1721 = vadd.f32 %v1719, %v1720
    %v1722 = vrot.slane %v1721, 1
    %v1723 = vadd.f32 %v1721, %v1722
    %v1724 = vadd.f32 %v1716, %v1723
    %v1725 = vmul.f32 %v1724, 0.0625
    %v1726 = vsub.f32 %v867, %v1725
    %v1727 = vmul.f32 %v1726, %v1726
    %v1728 = vsel %vm1660, %v1727, 0.0
    %v1729 = vrot.slane %v1728, 4
    %v1730 = vadd.f32 %v1728, %v1729
    %v1731 = vrot.slane %v1730, 2
    %v1732 = vadd.f32 %v1730, %v1731
    %v1733 = vrot.slane %v1732, 1
    %v1734 = vadd.f32 %v1732, %v1733
    %v1735 = vadd.f32 %v1734, 0.0
    %v1736 = vsub.f32 %v979, %v1725
    %v1737 = vmul.f32 %v1736, %v1736
    %v1738 = vsel %vm1660, %v1737, 0.0
    %v1739 = vrot.slane %v1738, 4
    %v1740 = vadd.f32 %v1738, %v1739
    %v1741 = vrot.slane %v1740, 2
    %v1742 = vadd.f32 %v1740, %v1741
    %v1743 = vrot.slane %v1742, 1
    %v1744 = vadd.f32 %v1742, %v1743
    %v1745 = vadd.f32 %v1735, %v1744
    %v1746 = vsub.f32 %v1091, %v1725
    %v1747 = vmul.f32 %v1746, %v1746
    %v1748 = vsel %vm1660, %v1747, 0.0
    %v1749 = vrot.slane %v1748, 4
    %v1750 = vadd.f32 %v1748, %v1749
    %v1751 = vrot.slane %v1750, 2
    %v1752 = vadd.f32 %v1750, %v1751
    %v1753 = vrot.slane %v1752, 1
    %v1754 = vadd.f32 %v1752, %v1753
    %v1755 = vadd.f32 %v1745, %v1754
    %v1756 = vsub.f32 %v1203, %v1725
    %v1757 = vmul.f32 %v1756, %v1756
    %v1758 = vsel %vm1660, %v1757, 0.0
    %v1759 = vrot.slane %v1758, 4
    %v1760 = vadd.f32 %v1758, %v1759
    %v1761 = vrot.slane %v1760, 2
    %v1762 = vadd.f32 %v1760, %v1761
    %v1763 = vrot.slane %v1762, 1
    %v1764 = vadd.f32 %v1762, %v1763
    %v1765 = vadd.f32 %v1755, %v1764
    %v1766 = vsub.f32 %v1315, %v1725
    %v1767 = vmul.f32 %v1766, %v1766
    %v1768 = vsel %vm1660, %v1767, 0.0
    %v1769 = vrot.slane %v1768, 4
    %v1770 = vadd.f32 %v1768, %v1769
    %v1771 = vrot.slane %v1770, 2
    %v1772 = vadd.f32 %v1770, %v1771
    %v1773 = vrot.slane %v1772, 1
    %v1774 = vadd.f32 %v1772, %v1773
    %v1775 = vadd.f32 %v1765, %v1774
    %v1776 = vsub.f32 %v1427, %v1725
    %v1777 = vmul.f32 %v1776, %v1776
    %v1778 = vsel %vm1660, %v1777, 0.0
    %v1779 = vrot.slane %v1778, 4
    %v1780 = vadd.f32 %v1778, %v1779
    %v1781 = vrot.slane %v1780, 2
    %v1782 = vadd.f32 %v1780, %v1781
    %v1783 = vrot.slane %v1782, 1
    %v1784 = vadd.f32 %v1782, %v1783
    %v1785 = vadd.f32 %v1775, %v1784
    %v1786 = vsub.f32 %v1539, %v1725
    %v1787 = vmul.f32 %v1786, %v1786
    %v1788 = vsel %vm1660, %v1787, 0.0
    %v1789 = vrot.slane %v1788, 4
    %v1790 = vadd.f32 %v1788, %v1789
    %v1791 = vrot.slane %v1790, 2
    %v1792 = vadd.f32 %v1790, %v1791
    %v1793 = vrot.slane %v1792, 1
    %v1794 = vadd.f32 %v1792, %v1793
    %v1795 = vadd.f32 %v1785, %v1794
    %v1796 = vsub.f32 %v1659, %v1725
    %v1797 = vmul.f32 %v1796, %v1796
    %v1798 = vsel %vm1660, %v1797, 0.0
    %v1799 = vrot.slane %v1798, 4
    %v1800 = vadd.f32 %v1798, %v1799
    %v1801 = vrot.slane %v1800, 2
    %v1802 = vadd.f32 %v1800, %v1801
    %v1803 = vrot.slane %v1802, 1
    %v1804 = vadd.f32 %v1802, %v1803
    %v1805 = vadd.f32 %v1795, %v1804
    %v1806 = vmul.f32 %v1805, 0.0625
    %v1807 = vld [vmem:[%s3 + $0x2] sm:$0x1]
    %v1808 = vld [vmem:[%s3 + $0x3] sm:$0x1]
    %v1809 = vadd.f32 %v1806, 1e-05
    %v1810 = vrsqrt.pop %v1809
    %v1811 = vmul.f32 %v1796, %v1810
    %v1812 = vlaneseq
    %v1813 = vshrl.u32 %v1812, 7
    %v1814 = vsub.s32 0, %v1813
    %v1815 = vrot.slane %v1807, %v1814
    %1817 = vrot.lane.b32.xlu0 %v1815, 96
    %v1818 = vpop.permute.xlu0 %1817
    %v1820 = vmul.f32 %v1811, %v1818
    %v1821 = vlaneseq
    %v1822 = vshrl.u32 %v1821, 7
    %v1823 = vsub.s32 0, %v1822
    %v1824 = vrot.slane %v1808, %v1823
    %1826 = vrot.lane.b32.xlu0 %v1824, 96
    %v1827 = vpop.permute.xlu0 %1826
    %v1829 = vadd.f32 %v1820, %v1827
    %v1830 = vmax.f32 %v1829, 0.0
    %s1831 = scalar_lea.vmem [#allocation2], 32
    %v1832 = vld [vmem:[%s1831] sm:$0xf]
    %v1833 = vld [vmem:[%s1831 + $0x4] sm:$0xf]
    %v1834 = vld [vmem:[%s1831 + $0x8] sm:$0xf]
    %v1835 = vld [vmem:[%s1831 + $0xc] sm:$0xf]
    %v1836 = vpack.c.bf16 %v1830, %v1830
    %1838 = vrot.lane.b32.xlu0 %v1836, 32
    %v1839 = vpop.permute.xlu0 %1838
    %v1844 = vunpack.c.l.b16 %v1832
    %v1845 = vunpack.c.l.b16 %v1833
    %v1846 = vunpack.c.l.b16 %v1834
    %v1847 = vunpack.c.l.b16 %v1835
    %v1848 = vpack.c.b16 %v1845, %v1844
    %v1849 = vpack.c.b16 %v1847, %v1846
    %v1853 = vsel %vm107, %v1839, 0
    %1855 = vmatprep.subr.bf16.mxu0 0
    %1856 = vmatpush1.bf16.msra.mxu0 %v1848
    %1857 = vmatprep.subr.bf16.mxu0 0
    %1858 = vmatpush1.bf16.msra.mxu0 %v1849
    %1859 = vmatprep.subr.bf16.mxu0 0
    %1860 = vmatpush1.bf16.msra.mxu0 0
    %1861 = vmatprep.subr.bf16.mxu0 0
    %1862 = vmatpush1.bf16.msra.mxu0 0
    %1863 = vmatprep.subr.bf16.mxu0 0
    %1864 = vmatpush1.bf16.msra.mxu0 0
    %1865 = vmatprep.subr.bf16.mxu0 0
    %1866 = vmatpush1.bf16.msra.mxu0 0
    %1867 = vmatprep.subr.bf16.mxu0 0
    %1868 = vmatpush1.bf16.msra.mxu0 0
    %1869 = vmatprep.subr.bf16.mxu0 0
    %1870 = vmatpush1.bf16.msra.mxu0 0
    %1871 = vmatprep.subr.bf16.mxu0 0
    %1872 = vmatpush1.bf16.msra.mxu0 0
    %1873 = vmatprep.subr.bf16.mxu0 0
    %1874 = vmatpush1.bf16.msra.mxu0 0
    %1875 = vmatprep.subr.bf16.mxu0 0
    %1876 = vmatpush1.bf16.msra.mxu0 0
    %1877 = vmatprep.subr.bf16.mxu0 0
    %1878 = vmatpush1.bf16.msra.mxu0 0
    %1879 = vmatprep.subr.bf16.mxu0 0
    %1880 = vmatpush1.bf16.msra.mxu0 0
    %1881 = vmatprep.subr.bf16.mxu0 0
    %1882 = vmatpush1.bf16.msra.mxu0 0
    %1883 = vmatprep.subr.bf16.mxu0 0
    %1884 = vmatpush1.bf16.msra.mxu0 0
    %1885 = vmatprep.subr.bf16.mxu0 0
    %1886 = vmatpush1.bf16.msra.mxu0 0
    %1887 = vmatprep.mubr.bf16.mxu0 0
    %1888 = vmatmul.mubr.bf16.gmra.mrb[0].mxu0 %v1853
    %v1889 = vpop.f32.mrb[0].mxu0
    %v1890 = vadd.f32 0.0, %v1889
    %v1891 = vpop.f32.mrb[0].mxu0
    %v1892 = vpop.f32.mrb[0].mxu0
    %v1893 = vpop.f32.mrb[0].mxu0
    %1894 = vdwg.mxu0
    %v1895 = vld [vmem:[%s3 + $0x4] sm:$0x1]
    %v1896 = vlaneseq
    %v1897 = vshrl.u32 %v1896, 7
    %v1898 = vsub.s32 0, %v1897
    %v1899 = vrot.slane %v1895, %v1898
    %v1900 = vadd.f32 %v1890, %v1899
    %vm1901 = vcmask 58368
    %1902 = vst.msk [vmem:[#allocation5] sm:$0x3] %vm1901, %v1900
    // Predicated region
    $region22: #{lstm_cluster_forward.1} parent=1 // pred_check
      _
    $region23: #{lstm_cluster_forward.1} parent=1 // pred_check_branch
      %1904 = sbr.rel (0) target = $region25
    $region24: #{lstm_cluster_forward.1} parent=1 // pred_region
      %s1906 = ssub.s32 32, 32
      %1907 = vsyncadd [#allocation4], %s1906
      %s1909 = sshll.u32 [#allocation5], 4
      %s1910 = int_to_ptr.vmem [resolvable:$true] %s1909
      %1912 = dma.vmem_to_hbm [thread:$0]  %s1910, 32, %s4, [#allocation4]
    $region25: #{lstm_cluster_forward.1} parent=1 // pred_fallthru
      _
    // Predicated region
    $region26: #{lstm_cluster_forward.1} parent=1 // pred_check
      _
    $region27: #{lstm_cluster_forward.1} parent=1 // pred_check_branch
      %1914 = sbr.rel (0) target = $region29
    $region28: #{lstm_cluster_forward.1} parent=1 // pred_region
      %1915 = dma.done [#allocation4], 32
    $region29: #{lstm_cluster_forward.1} parent=1 // pred_fallthru
      _
    %1916 = vsyncpa [#allocation3], 1
    %1917 = vsyncpa [#allocation4], 1

</llo_original>
